<compile_context>
chip_gen: v5e
topology: v5e:2x2
jax: 0.10.0
libtpu: 0.0.40
codegen_flags: <defaults>
</compile_context>

<pallas_src>
import functools

import jax
import jax.numpy as jnp
from jax.experimental import pallas as pl
from jax.experimental.pallas import tpu as pltpu

LANE = 128


def _round_up(x, m):
    return ((x + m - 1) // m) * m


def _vmem_limit(est_bytes):
    return int(min(64 * 2**20, max(16 * 2**20, 2 * int(est_bytes))))


# ----------------------------------------------------------------------------
# Fused residual-block kernel: 1x1 expand -> 3x3 (pad=1, stride) -> 1x1 project
# (+ shortcut) with folded BN biases and ReLUs, all in one VMEM-resident pass.
# ----------------------------------------------------------------------------
def _block_kernel(*refs, stride, Ho, Wo_pad, has_proj):
    if has_proj:
        (x_ref, m_ref, w1_ref, b1_ref, w3_ref, b2_ref, w2_ref, wsc_ref, b3_ref,
         o_ref, y_ref) = refs
    else:
        (x_ref, m_ref, w1_ref, b1_ref, w3_ref, b2_ref, w2_ref, b3_ref,
         o_ref, y_ref) = refs
        wsc_ref = None
    s = stride
    P, Hpl, Wpl, Cin = x_ref.shape
    Cmid = w1_ref.shape[1]

    # --- 1x1 expand (+ folded-BN bias + ReLU) over the whole padded phase block
    # as a single MXU dot.  The border mask zeroes the conv-padding positions so
    # the 3x3 below sees exactly the reference's zero padding of the expanded y.
    xf = x_ref[...].reshape(P * Hpl * Wpl, Cin)
    y = jnp.dot(xf, w1_ref[...], preferred_element_type=jnp.float32) + b1_ref[...]
    y = jnp.maximum(y, 0.0) * m_ref[...].reshape(P * Hpl * Wpl, 1)
    y_ref[...] = y.astype(y_ref.dtype).reshape(P, Hpl, Wpl, Cmid)

    # --- 3x3 conv (pad=1, stride in {1,2}) as 9 shifted unit-stride MXU dots; the
    # stride is absorbed by the phase decomposition, so all slices are static.
    acc = None
    for t in range(9):
        dy, dx = t // 3, t % 3
        p = (dy % s) * s + (dx % s)          # phase plane index
        oy, ox = dy // s, dx // s            # offset within the phase plane
        win = y_ref[p, oy:oy + Ho, ox:ox + Wo_pad, :].reshape(Ho * Wo_pad, Cmid)
        d = jnp.dot(win, w3_ref[t], preferred_element_type=jnp.float32)
        acc = d if acc is None else acc + d
    y2 = jnp.maximum(acc + b2_ref[...], 0.0).astype(y_ref.dtype)

    # --- final 1x1 projection + shortcut fused into one f32 accumulator.
    out = jnp.dot(y2, w2_ref[...], preferred_element_type=jnp.float32)
    if s == 1:
        # shortcut input = x itself, already resident as phase plane 0 (offset 1,1).
        sc = x_ref[0, 1:1 + Ho, 1:1 + Wo_pad, :].reshape(Ho * Wo_pad, Cin)
    else:
        # strided shortcut x[::s, ::s] = phase plane (1,1), offset 0 (already in VMEM).
        sc = x_ref[s + 1, 0:Ho, 0:Wo_pad, :].reshape(Ho * Wo_pad, Cin)
    if has_proj:
        out = out + jnp.dot(sc, wsc_ref[...], preferred_element_type=jnp.float32)
    else:
        out = out + sc.astype(jnp.float32)
    o_ref[0] = jnp.maximum(out + b3_ref[...], 0.0).astype(o_ref.dtype)


def transformer_block_forward(x_nhwc, q):
    """One fused residual block. x_nhwc: (N,H,W,cin_p), channels already 128-padded."""
    N, H, W, cin_p = x_nhwc.shape
    s = q["stride"]
    cmid_p, cout_p = q["cmid_p"], q["cout_p"]
    has_proj = "wsc" in q
    dtype = x_nhwc.dtype

    Ho = (H - 1) // s + 1
    Wo = (W - 1) // s + 1
    Wo_pad = _round_up(Wo, 8)                      # lane-dense / reshape-trivial width
    Hpl = (2 // s) + Ho                            # phase-plane height needed
    Wpl_pad = _round_up((2 // s) + Wo_pad, 8)      # phase-plane width (8-aligned)

    pad_h = s * Hpl - H - 1
    pad_w = s * Wpl_pad - W - 1

    # spatial zero-pad by 1 (+ alignment padding, never read by valid outputs), then
    # split into s*s phase planes so the strided conv becomes unit-stride in-kernel.
    xp = jnp.pad(x_nhwc, ((0, 0), (1, pad_h), (1, pad_w), (0, 0)))
    xph = (xp.reshape(N, Hpl, s, Wpl_pad, s, cin_p)
             .transpose(0, 2, 4, 1, 3, 5)
             .reshape(N * s * s, Hpl, Wpl_pad, cin_p))

    # border mask (1 on real pixels, 0 on conv/alignment padding), same decomposition.
    mask = jnp.pad(jnp.ones((1, H, W, 1), jnp.float32),
                   ((0, 0), (1, pad_h), (1, pad_w), (0, 0)))
    mask = (mask.reshape(1, Hpl, s, Wpl_pad, s, 1)
                .transpose(0, 2, 4, 1, 3, 5)
                .reshape(s * s, Hpl, Wpl_pad, 1))

    in_specs = [
        pl.BlockSpec((s * s, Hpl, Wpl_pad, cin_p), lambda n: (n, 0, 0, 0)),
        pl.BlockSpec((s * s, Hpl, Wpl_pad, 1), lambda n: (0, 0, 0, 0)),
        pl.BlockSpec((cin_p, cmid_p), lambda n: (0, 0)),
        pl.BlockSpec((1, cmid_p), lambda n: (0, 0)),
        pl.BlockSpec((9, cmid_p, cmid_p), lambda n: (0, 0, 0)),
        pl.BlockSpec((1, cmid_p), lambda n: (0, 0)),
        pl.BlockSpec((cmid_p, cout_p), lambda n: (0, 0)),
    ]
    args = [xph, mask, q["w1"], q["b1"].reshape(1, cmid_p),
            q["w3"], q["b2"].reshape(1, cmid_p), q["w2"]]
    if has_proj:
        in_specs.append(pl.BlockSpec((cin_p, cout_p), lambda n: (0, 0)))
        args.append(q["wsc"])
    in_specs.append(pl.BlockSpec((1, cout_p), lambda n: (0, 0)))
    args.append(q["b3"].reshape(1, cout_p))

    act_item = jnp.dtype(dtype).itemsize
    w_item = jnp.dtype(q["w1"].dtype).itemsize
    x_bytes = s * s * Hpl * Wpl_pad * cin_p * act_item
    m_bytes = s * s * Hpl * Wpl_pad * 4
    y_bytes = s * s * Hpl * Wpl_pad * cmid_p * act_item
    o_bytes = Ho * Wo_pad * cout_p * act_item
    w_bytes = ((cin_p * cmid_p + 9 * cmid_p * cmid_p + cmid_p * cout_p
                + (cin_p * cout_p if has_proj else 0)) * w_item
               + (2 * cmid_p + cout_p) * 4)
    step_bytes = 2 * (x_bytes + m_bytes + o_bytes) + 2 * w_bytes + y_bytes

    Mx = s * s * Hpl * Wpl_pad
    Mo = Ho * Wo_pad
    flops = 2 * N * (Mx * cin_p * cmid_p + 9 * Mo * cmid_p * cmid_p
                     + Mo * cmid_p * cout_p
                     + (Mo * cin_p * cout_p if has_proj else 0))
    bytes_accessed = int(N * (x_bytes + m_bytes + o_bytes) + w_bytes)

    # TODO(synk): for very large H*W*C a spatial (row-tile + halo) grid would be
    # needed; one whole image per grid step is fine for typical RegNet stage sizes.
    kernel = functools.partial(_block_kernel, stride=s, Ho=Ho, Wo_pad=Wo_pad,
                               has_proj=has_proj)
    out = pl.pallas_call(
        kernel,
        out_shape=jax.ShapeDtypeStruct((N, Ho * Wo_pad, cout_p), dtype),
        grid=(N,),
        in_specs=in_specs,
        out_specs=pl.BlockSpec((1, Ho * Wo_pad, cout_p), lambda n: (n, 0, 0)),
        scratch_shapes=[pltpu.VMEM((s * s, Hpl, Wpl_pad, cmid_p), dtype)],
        compiler_params=pltpu.CompilerParams(
            dimension_semantics=("parallel",),
            vmem_limit_bytes=_vmem_limit(step_bytes)),
        cost_estimate=pl.CostEstimate(flops=flops, transcendentals=0,
                                      bytes_accessed=bytes_accessed),
    )(*args)

    out = out.reshape(N, Ho, Wo_pad, cout_p)
    if Wo_pad != Wo:
        out = out[:, :, :Wo, :]
    return out


# ----------------------------------------------------------------------------
# Parameters: raw init (for the reference) + folded/padded prep (for the kernel)
# ----------------------------------------------------------------------------
def fold_bn(gamma, beta, mean, var, eps=1e-5):
    scale = gamma / jnp.sqrt(var + eps)
    bias = beta - mean * scale
    return scale, bias


def init_bn(key, c):
    k1, k2, k3, k4 = jax.random.split(key, 4)
    gamma = 1.0 + 0.1 * jax.random.normal(k1, (c,), jnp.float32)
    beta = 0.1 * jax.random.normal(k2, (c,), jnp.float32)
    mean = 0.05 * jax.random.normal(k3, (c,), jnp.float32)
    var = 1.0 + 0.2 * jax.random.uniform(k4, (c,), jnp.float32)
    return fold_bn(gamma, beta, mean, var)


def init_block(key, cin, cout, stride):
    keys = jax.random.split(key, 8)
    cmid = cout
    p = {"stride": stride}
    p["w1"] = 0.1 * jax.random.normal(keys[0], (cin, cmid), jnp.float32)
    p["s1"], p["b1"] = init_bn(keys[1], cmid)
    p["w3"] = 0.1 * jax.random.normal(keys[2], (3, 3, cmid, cmid), jnp.float32)
    p["s2"], p["b2"] = init_bn(keys[3], cmid)
    p["w2"] = 0.1 * jax.random.normal(keys[4], (cmid, cout), jnp.float32)
    p["s3"], p["b3"] = init_bn(keys[5], cout)
    if stride != 1 or cin != cout:
        p["wsc"] = 0.1 * jax.random.normal(keys[6], (cin, cout), jnp.float32)
        p["ssc"], p["bsc"] = init_bn(keys[7], cout)
    return p


def init_stage(key, in_channels, out_channels, num_blocks, stride):
    keys = jax.random.split(key, num_blocks)
    blocks = [init_block(keys[0], in_channels, out_channels, stride)]
    for i in range(1, num_blocks):
        blocks.append(init_block(keys[i], out_channels, out_channels, 1))
    return blocks


def prepare_block(p, compute_dtype):
    """Fold BN scale into weights; zero-pad all channel dims to multiples of 128."""
    cin, cmid = p["w1"].shape
    cout = p["w2"].shape[1]
    cin_p, cmid_p, cout_p = (_round_up(c, LANE) for c in (cin, cmid, cout))

    def pad2(w, r, c):
        return jnp.pad(w, ((0, r - w.shape[0]), (0, c - w.shape[1])))

    def pad1(b, c):
        return jnp.pad(b, (0, c - b.shape[0]))

    q = {"stride": p["stride"], "cin_p": cin_p, "cmid_p": cmid_p, "cout_p": cout_p}
    # (x@w)*s + b == x@(w*s) + b  -> fold once on constants.
    q["w1"] = pad2(p["w1"] * p["s1"][None, :], cin_p, cmid_p).astype(compute_dtype)
    q["b1"] = pad1(p["b1"], cmid_p).astype(jnp.float32)
    w3 = (p["w3"] * p["s2"][None, None, None, :]).reshape(9, cmid, cmid)
    q["w3"] = jnp.pad(w3, ((0, 0), (0, cmid_p - cmid), (0, cmid_p - cmid))).astype(compute_dtype)
    q["b2"] = pad1(p["b2"], cmid_p).astype(jnp.float32)
    q["w2"] = pad2(p["w2"] * p["s3"][None, :], cmid_p, cout_p).astype(compute_dtype)
    b3 = pad1(p["b3"], cout_p)
    if "wsc" in p:
        q["wsc"] = pad2(p["wsc"] * p["ssc"][None, :], cin_p, cout_p).astype(compute_dtype)
        b3 = b3 + pad1(p["bsc"], cout_p)        # both biases land in the same epilogue
    q["b3"] = b3.astype(jnp.float32)
    return q


def prepare_stage(blocks, compute_dtype=jnp.float32):
    return [prepare_block(p, compute_dtype) for p in blocks]


# ----------------------------------------------------------------------------
# Forward pass (one fused Pallas kernel per block)
# ----------------------------------------------------------------------------
def transformer_stage_forward(x_nchw, prepared, out_channels, compute_dtype=jnp.float32):
    # layout: NCHW (PyTorch) -> NHWC for the kernels; channels padded to 128 once.
    x = jnp.transpose(x_nchw, (0, 2, 3, 1))
    cin = x.shape[-1]
    cin_p = prepared[0]["cin_p"]
    x = jnp.pad(x, ((0, 0), (0, 0), (0, 0), (0, cin_p - cin))).astype(compute_dtype)
    for q in prepared:
        x = transformer_block_forward(x, q)
    x = x[..., :out_channels].astype(jnp.float32)
    return jnp.transpose(x, (0, 3, 1, 2))


# ----------------------------------------------------------------------------
# Pure-JAX reference (for correctness sanity check)
# ----------------------------------------------------------------------------
def _ref_conv(x, w, stride, padding):
    return jax.lax.conv_general_dilated(
        x, w, (stride, stride), padding,
        dimension_numbers=("NHWC", "HWIO", "NHWC"))


def _ref_block(x, p):
    stride = p["stride"]
    cin = p["w1"].shape[0]
    cmid = p["w1"].shape[1]
    y = _ref_conv(x, p["w1"].reshape(1, 1, cin, cmid), 1, "VALID")
    y = jnp.maximum(y * p["s1"] + p["b1"], 0.0)
    y = _ref_conv(y, p["w3"], stride, [(1, 1), (1, 1)])
    y = jnp.maximum(y * p["s2"] + p["b2"], 0.0)
    z = _ref_conv(y, p["w2"].reshape(1, 1, cmid, p["w2"].shape[1]), 1, "VALID")
    z = z * p["s3"] + p["b3"]
    if "wsc" in p:
        sc = _ref_conv(x, p["wsc"].reshape(1, 1, cin, p["wsc"].shape[1]), stride, "VALID")
        sc = sc * p["ssc"] + p["bsc"]
    else:
        sc = x
    return jnp.maximum(z + sc, 0.0)


def _ref_stage(x_nchw, blocks):
    x = jnp.transpose(x_nchw, (0, 2, 3, 1))
    for p in blocks:
        x = _ref_block(x, p)
    return jnp.transpose(x, (0, 3, 1, 2))


# ----------------------------------------------------------------------------
if __name__ == "__main__":
    key = jax.random.PRNGKey(0)
    k_x, k_params = jax.random.split(key)

    # TransformerStage(in_channels=4, out_channels=8, num_blocks=2, stride=2)
    in_channels, out_channels, num_blocks, stride = 4, 8, 2, 2
    x = jax.random.normal(k_x, (2, in_channels, 16, 16), jnp.float32)  # NCHW

    raw_blocks = init_stage(k_params, in_channels, out_channels, num_blocks, stride)
    ref = jax.block_until_ready(_ref_stage(x, raw_blocks))

    # float32 path: tight check against the pure-JAX reference.
    prep_f32 = prepare_stage(raw_blocks, jnp.float32)
    out_f32 = jax.block_until_ready(
        transformer_stage_forward(x, prep_f32, out_channels, jnp.float32))
    assert out_f32.shape == (2, out_channels, 8, 8), out_f32.shape
    assert jnp.allclose(out_f32, ref, rtol=1e-4, atol=1e-4), float(
        jnp.max(jnp.abs(out_f32 - ref)))

    # bfloat16 path: halved HBM/VMEM traffic, f32 MXU accumulation; loose check.
    prep_bf16 = prepare_stage(raw_blocks, jnp.bfloat16)
    out_bf16 = jax.block_until_ready(
        transformer_stage_forward(x, prep_bf16, out_channels, jnp.bfloat16))
    assert out_bf16.shape == (2, out_channels, 8, 8), out_bf16.shape
    assert jnp.allclose(out_bf16, ref, rtol=5e-2, atol=5e-2), float(
        jnp.max(jnp.abs(out_bf16 - ref)))

    print("KERNEL_OK")
</pallas_src>

<mosaic_0001>
module attributes {stable_mosaic.version = 11 : i64} {
  func.func @_block_kernel(%arg0: i32, %arg1: memref<4x9x16x128xf32, #tpu.memory_space<vmem>>, %arg2: memref<4x9x16x1xf32, #tpu.memory_space<vmem>>, %arg3: memref<128x128xf32, #tpu.memory_space<vmem>>, %arg4: memref<1x128xf32, #tpu.memory_space<vmem>>, %arg5: memref<9x128x128xf32, #tpu.memory_space<vmem>>, %arg6: memref<1x128xf32, #tpu.memory_space<vmem>>, %arg7: memref<128x128xf32, #tpu.memory_space<vmem>>, %arg8: memref<128x128xf32, #tpu.memory_space<vmem>>, %arg9: memref<1x128xf32, #tpu.memory_space<vmem>>, %arg10: memref<1x64x128xf32, #tpu.memory_space<vmem>>, %arg11: memref<4x9x16x128xf32, #tpu.memory_space<vmem>>) attributes {dimension_semantics = [#tpu.dimension_semantics<parallel>], iteration_bounds = array<i64: 2>, scalar_prefetch = 0 : i64, scratch_operands = 1 : i64, tpu.core_type = #tpu.core_type<tc>, window_params = [{transform_indices = @transform_0, window_bounds = array<i64: 4, 9, 16, 128>}, {pipeline_mode = #tpu.pipeline_mode<synchronous>, transform_indices = @transform_1, window_bounds = array<i64: 4, 9, 16, 1>}, {pipeline_mode = #tpu.pipeline_mode<synchronous>, transform_indices = @transform_2, window_bounds = array<i64: 128, 128>}, {pipeline_mode = #tpu.pipeline_mode<synchronous>, transform_indices = @transform_3, window_bounds = array<i64: 1, 128>}, {pipeline_mode = #tpu.pipeline_mode<synchronous>, transform_indices = @transform_4, window_bounds = array<i64: 9, 128, 128>}, {pipeline_mode = #tpu.pipeline_mode<synchronous>, transform_indices = @transform_5, window_bounds = array<i64: 1, 128>}, {pipeline_mode = #tpu.pipeline_mode<synchronous>, transform_indices = @transform_6, window_bounds = array<i64: 128, 128>}, {pipeline_mode = #tpu.pipeline_mode<synchronous>, transform_indices = @transform_7, window_bounds = array<i64: 128, 128>}, {pipeline_mode = #tpu.pipeline_mode<synchronous>, transform_indices = @transform_8, window_bounds = array<i64: 1, 128>}, {transform_indices = @transform_9, window_bounds = array<i64: 1, 64, 128>}]} {
    %c0 = arith.constant 0 : index
    %c0_0 = arith.constant 0 : index
    %c0_1 = arith.constant 0 : index
    %c0_2 = arith.constant 0 : index
    %0 = vector.load %arg1[%c0, %c0_0, %c0_1, %c0_2] : memref<4x9x16x128xf32, #tpu.memory_space<vmem>>, vector<4x9x16x128xf32>
    %1 = vector.shape_cast %0 : vector<4x9x16x128xf32> to vector<576x128xf32>
    %c0_3 = arith.constant 0 : index
    %c0_4 = arith.constant 0 : index
    %2 = vector.load %arg3[%c0_3, %c0_4] : memref<128x128xf32, #tpu.memory_space<vmem>>, vector<128x128xf32>
    %cst = arith.constant dense<0.000000e+00> : vector<576x128xf32>
    %3 = tpu.matmul %1, %2, %cst {dimension_numbers = #tpu.dot_dimension_numbers<[1], [0], [0], [1], [0, 0, 1, 1], [], []>} : vector<576x128xf32>, vector<128x128xf32>, vector<576x128xf32> -> vector<576x128xf32>
    %c0_5 = arith.constant 0 : index
    %c0_6 = arith.constant 0 : index
    %4 = vector.load %arg4[%c0_5, %c0_6] : memref<1x128xf32, #tpu.memory_space<vmem>>, vector<1x128xf32>
    %5 = vector.broadcast %4 : vector<1x128xf32> to vector<576x128xf32>
    %6 = arith.addf %3, %5 : vector<576x128xf32>
    %cst_7 = arith.constant 0.000000e+00 : f32
    %7 = vector.broadcast %cst_7 : f32 to vector<576x128xf32>
    %8 = arith.maximumf %6, %7 : vector<576x128xf32>
    %c0_8 = arith.constant 0 : index
    %c0_9 = arith.constant 0 : index
    %c0_10 = arith.constant 0 : index
    %c0_11 = arith.constant 0 : index
    %9 = vector.load %arg2[%c0_8, %c0_9, %c0_10, %c0_11] : memref<4x9x16x1xf32, #tpu.memory_space<vmem>>, vector<4x9x16x1xf32>
    %10 = vector.shape_cast %9 : vector<4x9x16x1xf32> to vector<576x1xf32>
    %11 = vector.broadcast %10 : vector<576x1xf32> to vector<576x128xf32>
    %12 = arith.mulf %8, %11 : vector<576x128xf32>
    %13 = vector.shape_cast %12 : vector<576x128xf32> to vector<4x9x16x128xf32>
    %c0_12 = arith.constant 0 : index
    %c0_13 = arith.constant 0 : index
    %c0_14 = arith.constant 0 : index
    %c0_15 = arith.constant 0 : index
    %14 = vector.load %arg11[%c0_12, %c0_13, %c0_14, %c0_15] : memref<4x9x16x128xf32, #tpu.memory_space<vmem>>, vector<4x9x16x128xf32>
    tpu.vector_store %arg11[%c0_12, %c0_13, %c0_14, %c0_15], %13 {strides = array<i32>} : memref<4x9x16x128xf32, #tpu.memory_space<vmem>>, vector<4x9x16x128xf32>,
    %c0_16 = arith.constant 0 : index
    %c0_17 = arith.constant 0 : index
    %c0_18 = arith.constant 0 : index
    %c0_19 = arith.constant 0 : index
    %15 = vector.load %arg11[%c0_16, %c0_17, %c0_18, %c0_19] : memref<4x9x16x128xf32, #tpu.memory_space<vmem>>, vector<1x8x8x128xf32>
    %16 = vector.shape_cast %15 : vector<1x8x8x128xf32> to vector<8x8x128xf32>
    %17 = vector.shape_cast %16 : vector<8x8x128xf32> to vector<64x128xf32>
    %c0_20 = arith.constant 0 : index
    %c0_21 = arith.constant 0 : index
    %c0_22 = arith.constant 0 : index
    %18 = vector.load %arg5[%c0_20, %c0_21, %c0_22] : memref<9x128x128xf32, #tpu.memory_space<vmem>>, vector<1x128x128xf32>
    %19 = vector.shape_cast %18 : vector<1x128x128xf32> to vector<128x128xf32>
    %cst_23 = arith.constant dense<0.000000e+00> : vector<64x128xf32>
    %20 = tpu.matmul %17, %19, %cst_23 {dimension_numbers = #tpu.dot_dimension_numbers<[1], [0], [0], [1], [0, 0, 1, 1], [], []>} : vector<64x128xf32>, vector<128x128xf32>, vector<64x128xf32> -> vector<64x128xf32>
    %c1 = arith.constant 1 : index
    %c0_24 = arith.constant 0 : index
    %c0_25 = arith.constant 0 : index
    %c0_26 = arith.constant 0 : index
    %21 = vector.load %arg11[%c1, %c0_24, %c0_25, %c0_26] : memref<4x9x16x128xf32, #tpu.memory_space<vmem>>, vector<1x8x8x128xf32>
    %22 = vector.shape_cast %21 : vector<1x8x8x128xf32> to vector<8x8x128xf32>
    %23 = vector.shape_cast %22 : vector<8x8x128xf32> to vector<64x128xf32>
    %c1_27 = arith.constant 1 : index
    %c0_28 = arith.constant 0 : index
    %c0_29 = arith.constant 0 : index
    %24 = vector.load %arg5[%c1_27, %c0_28, %c0_29] : memref<9x128x128xf32, #tpu.memory_space<vmem>>, vector<1x128x128xf32>
    %25 = vector.shape_cast %24 : vector<1x128x128xf32> to vector<128x128xf32>
    %cst_30 = arith.constant dense<0.000000e+00> : vector<64x128xf32>
    %26 = tpu.matmul %23, %25, %cst_30 {dimension_numbers = #tpu.dot_dimension_numbers<[1], [0], [0], [1], [0, 0, 1, 1], [], []>} : vector<64x128xf32>, vector<128x128xf32>, vector<64x128xf32> -> vector<64x128xf32>
    %27 = arith.addf %20, %26 : vector<64x128xf32>
    %c0_31 = arith.constant 0 : index
    %c0_32 = arith.constant 0 : index
    %c1_33 = arith.constant 1 : index
    %c0_34 = arith.constant 0 : index
    %28 = vector.load %arg11[%c0_31, %c0_32, %c1_33, %c0_34] : memref<4x9x16x128xf32, #tpu.memory_space<vmem>>, vector<1x8x8x128xf32>
    %29 = vector.shape_cast %28 : vector<1x8x8x128xf32> to vector<8x8x128xf32>
    %30 = vector.shape_cast %29 : vector<8x8x128xf32> to vector<64x128xf32>
    %c2 = arith.constant 2 : index
    %c0_35 = arith.constant 0 : index
    %c0_36 = arith.constant 0 : index
    %31 = vector.load %arg5[%c2, %c0_35, %c0_36] : memref<9x128x128xf32, #tpu.memory_space<vmem>>, vector<1x128x128xf32>
    %32 = vector.shape_cast %31 : vector<1x128x128xf32> to vector<128x128xf32>
    %cst_37 = arith.constant dense<0.000000e+00> : vector<64x128xf32>
    %33 = tpu.matmul %30, %32, %cst_37 {dimension_numbers = #tpu.dot_dimension_numbers<[1], [0], [0], [1], [0, 0, 1, 1], [], []>} : vector<64x128xf32>, vector<128x128xf32>, vector<64x128xf32> -> vector<64x128xf32>
    %34 = arith.addf %27, %33 : vector<64x128xf32>
    %c2_38 = arith.constant 2 : index
    %c0_39 = arith.constant 0 : index
    %c0_40 = arith.constant 0 : index
    %c0_41 = arith.constant 0 : index
    %35 = vector.load %arg11[%c2_38, %c0_39, %c0_40, %c0_41] : memref<4x9x16x128xf32, #tpu.memory_space<vmem>>, vector<1x8x8x128xf32>
    %36 = vector.shape_cast %35 : vector<1x8x8x128xf32> to vector<8x8x128xf32>
    %37 = vector.shape_cast %36 : vector<8x8x128xf32> to vector<64x128xf32>
    %c3 = arith.constant 3 : index
    %c0_42 = arith.constant 0 : index
    %c0_43 = arith.constant 0 : index
    %38 = vector.load %arg5[%c3, %c0_42, %c0_43] : memref<9x128x128xf32, #tpu.memory_space<vmem>>, vector<1x128x128xf32>
    %39 = vector.shape_cast %38 : vector<1x128x128xf32> to vector<128x128xf32>
    %cst_44 = arith.constant dense<0.000000e+00> : vector<64x128xf32>
    %40 = tpu.matmul %37, %39, %cst_44 {dimension_numbers = #tpu.dot_dimension_numbers<[1], [0], [0], [1], [0, 0, 1, 1], [], []>} : vector<64x128xf32>, vector<128x128xf32>, vector<64x128xf32> -> vector<64x128xf32>
    %41 = arith.addf %34, %40 : vector<64x128xf32>
    %c3_45 = arith.constant 3 : index
    %c0_46 = arith.constant 0 : index
    %c0_47 = arith.constant 0 : index
    %c0_48 = arith.constant 0 : index
    %42 = vector.load %arg11[%c3_45, %c0_46, %c0_47, %c0_48] : memref<4x9x16x128xf32, #tpu.memory_space<vmem>>, vector<1x8x8x128xf32>
    %43 = vector.shape_cast %42 : vector<1x8x8x128xf32> to vector<8x8x128xf32>
    %44 = vector.shape_cast %43 : vector<8x8x128xf32> to vector<64x128xf32>
    %c4 = arith.constant 4 : index
    %c0_49 = arith.constant 0 : index
    %c0_50 = arith.constant 0 : index
    %45 = vector.load %arg5[%c4, %c0_49, %c0_50] : memref<9x128x128xf32, #tpu.memory_space<vmem>>, vector<1x128x128xf32>
    %46 = vector.shape_cast %45 : vector<1x128x128xf32> to vector<128x128xf32>
    %cst_51 = arith.constant dense<0.000000e+00> : vector<64x128xf32>
    %47 = tpu.matmul %44, %46, %cst_51 {dimension_numbers = #tpu.dot_dimension_numbers<[1], [0], [0], [1], [0, 0, 1, 1], [], []>} : vector<64x128xf32>, vector<128x128xf32>, vector<64x128xf32> -> vector<64x128xf32>
    %48 = arith.addf %41, %47 : vector<64x128xf32>
    %c2_52 = arith.constant 2 : index
    %c0_53 = arith.constant 0 : index
    %c1_54 = arith.constant 1 : index
    %c0_55 = arith.constant 0 : index
    %49 = vector.load %arg11[%c2_52, %c0_53, %c1_54, %c0_55] : memref<4x9x16x128xf32, #tpu.memory_space<vmem>>, vector<1x8x8x128xf32>
    %50 = vector.shape_cast %49 : vector<1x8x8x128xf32> to vector<8x8x128xf32>
    %51 = vector.shape_cast %50 : vector<8x8x128xf32> to vector<64x128xf32>
    %c5 = arith.constant 5 : index
    %c0_56 = arith.constant 0 : index
    %c0_57 = arith.constant 0 : index
    %52 = vector.load %arg5[%c5, %c0_56, %c0_57] : memref<9x128x128xf32, #tpu.memory_space<vmem>>, vector<1x128x128xf32>
    %53 = vector.shape_cast %52 : vector<1x128x128xf32> to vector<128x128xf32>
    %cst_58 = arith.constant dense<0.000000e+00> : vector<64x128xf32>
    %54 = tpu.matmul %51, %53, %cst_58 {dimension_numbers = #tpu.dot_dimension_numbers<[1], [0], [0], [1], [0, 0, 1, 1], [], []>} : vector<64x128xf32>, vector<128x128xf32>, vector<64x128xf32> -> vector<64x128xf32>
    %55 = arith.addf %48, %54 : vector<64x128xf32>
    %c0_59 = arith.constant 0 : index
    %c1_60 = arith.constant 1 : index
    %c0_61 = arith.constant 0 : index
    %c0_62 = arith.constant 0 : index
    %56 = vector.load %arg11[%c0_59, %c1_60, %c0_61, %c0_62] : memref<4x9x16x128xf32, #tpu.memory_space<vmem>>, vector<1x8x8x128xf32>
    %57 = vector.shape_cast %56 : vector<1x8x8x128xf32> to vector<8x8x128xf32>
    %58 = vector.shape_cast %57 : vector<8x8x128xf32> to vector<64x128xf32>
    %c6 = arith.constant 6 : index
    %c0_63 = arith.constant 0 : index
    %c0_64 = arith.constant 0 : index
    %59 = vector.load %arg5[%c6, %c0_63, %c0_64] : memref<9x128x128xf32, #tpu.memory_space<vmem>>, vector<1x128x128xf32>
    %60 = vector.shape_cast %59 : vector<1x128x128xf32> to vector<128x128xf32>
    %cst_65 = arith.constant dense<0.000000e+00> : vector<64x128xf32>
    %61 = tpu.matmul %58, %60, %cst_65 {dimension_numbers = #tpu.dot_dimension_numbers<[1], [0], [0], [1], [0, 0, 1, 1], [], []>} : vector<64x128xf32>, vector<128x128xf32>, vector<64x128xf32> -> vector<64x128xf32>
    %62 = arith.addf %55, %61 : vector<64x128xf32>
    %c1_66 = arith.constant 1 : index
    %c1_67 = arith.constant 1 : index
    %c0_68 = arith.constant 0 : index
    %c0_69 = arith.constant 0 : index
    %63 = vector.load %arg11[%c1_66, %c1_67, %c0_68, %c0_69] : memref<4x9x16x128xf32, #tpu.memory_space<vmem>>, vector<1x8x8x128xf32>
    %64 = vector.shape_cast %63 : vector<1x8x8x128xf32> to vector<8x8x128xf32>
    %65 = vector.shape_cast %64 : vector<8x8x128xf32> to vector<64x128xf32>
    %c7 = arith.constant 7 : index
    %c0_70 = arith.constant 0 : index
    %c0_71 = arith.constant 0 : index
    %66 = vector.load %arg5[%c7, %c0_70, %c0_71] : memref<9x128x128xf32, #tpu.memory_space<vmem>>, vector<1x128x128xf32>
    %67 = vector.shape_cast %66 : vector<1x128x128xf32> to vector<128x128xf32>
    %cst_72 = arith.constant dense<0.000000e+00> : vector<64x128xf32>
    %68 = tpu.matmul %65, %67, %cst_72 {dimension_numbers = #tpu.dot_dimension_numbers<[1], [0], [0], [1], [0, 0, 1, 1], [], []>} : vector<64x128xf32>, vector<128x128xf32>, vector<64x128xf32> -> vector<64x128xf32>
    %69 = arith.addf %62, %68 : vector<64x128xf32>
    %c0_73 = arith.constant 0 : index
    %c1_74 = arith.constant 1 : index
    %c1_75 = arith.constant 1 : index
    %c0_76 = arith.constant 0 : index
    %70 = vector.load %arg11[%c0_73, %c1_74, %c1_75, %c0_76] : memref<4x9x16x128xf32, #tpu.memory_space<vmem>>, vector<1x8x8x128xf32>
    %71 = vector.shape_cast %70 : vector<1x8x8x128xf32> to vector<8x8x128xf32>
    %72 = vector.shape_cast %71 : vector<8x8x128xf32> to vector<64x128xf32>
    %c8 = arith.constant 8 : index
    %c0_77 = arith.constant 0 : index
    %c0_78 = arith.constant 0 : index
    %73 = vector.load %arg5[%c8, %c0_77, %c0_78] : memref<9x128x128xf32, #tpu.memory_space<vmem>>, vector<1x128x128xf32>
    %74 = vector.shape_cast %73 : vector<1x128x128xf32> to vector<128x128xf32>
    %cst_79 = arith.constant dense<0.000000e+00> : vector<64x128xf32>
    %75 = tpu.matmul %72, %74, %cst_79 {dimension_numbers = #tpu.dot_dimension_numbers<[1], [0], [0], [1], [0, 0, 1, 1], [], []>} : vector<64x128xf32>, vector<128x128xf32>, vector<64x128xf32> -> vector<64x128xf32>
    %76 = arith.addf %69, %75 : vector<64x128xf32>
    %c0_80 = arith.constant 0 : index
    %c0_81 = arith.constant 0 : index
    %77 = vector.load %arg6[%c0_80, %c0_81] : memref<1x128xf32, #tpu.memory_space<vmem>>, vector<1x128xf32>
    %78 = vector.broadcast %77 : vector<1x128xf32> to vector<64x128xf32>
    %79 = arith.addf %76, %78 : vector<64x128xf32>
    %cst_82 = arith.constant 0.000000e+00 : f32
    %80 = vector.broadcast %cst_82 : f32 to vector<64x128xf32>
    %81 = arith.maximumf %79, %80 : vector<64x128xf32>
    %c0_83 = arith.constant 0 : index
    %c0_84 = arith.constant 0 : index
    %82 = vector.load %arg7[%c0_83, %c0_84] : memref<128x128xf32, #tpu.memory_space<vmem>>, vector<128x128xf32>
    %cst_85 = arith.constant dense<0.000000e+00> : vector<64x128xf32>
    %83 = tpu.matmul %81, %82, %cst_85 {dimension_numbers = #tpu.dot_dimension_numbers<[1], [0], [0], [1], [0, 0, 1, 1], [], []>} : vector<64x128xf32>, vector<128x128xf32>, vector<64x128xf32> -> vector<64x128xf32>
    %c3_86 = arith.constant 3 : index
    %c0_87 = arith.constant 0 : index
    %c0_88 = arith.constant 0 : index
    %c0_89 = arith.constant 0 : index
    %84 = vector.load %arg1[%c3_86, %c0_87, %c0_88, %c0_89] : memref<4x9x16x128xf32, #tpu.memory_space<vmem>>, vector<1x8x8x128xf32>
    %85 = vector.shape_cast %84 : vector<1x8x8x128xf32> to vector<8x8x128xf32>
    %86 = vector.shape_cast %85 : vector<8x8x128xf32> to vector<64x128xf32>
    %c0_90 = arith.constant 0 : index
    %c0_91 = arith.constant 0 : index
    %87 = vector.load %arg8[%c0_90, %c0_91] : memref<128x128xf32, #tpu.memory_space<vmem>>, vector<128x128xf32>
    %cst_92 = arith.constant dense<0.000000e+00> : vector<64x128xf32>
    %88 = tpu.matmul %86, %87, %cst_92 {dimension_numbers = #tpu.dot_dimension_numbers<[1], [0], [0], [1], [0, 0, 1, 1], [], []>} : vector<64x128xf32>, vector<128x128xf32>, vector<64x128xf32> -> vector<64x128xf32>
    %89 = arith.addf %83, %88 : vector<64x128xf32>
    %c0_93 = arith.constant 0 : index
    %c0_94 = arith.constant 0 : index
    %90 = vector.load %arg9[%c0_93, %c0_94] : memref<1x128xf32, #tpu.memory_space<vmem>>, vector<1x128xf32>
    %91 = vector.broadcast %90 : vector<1x128xf32> to vector<64x128xf32>
    %92 = arith.addf %89, %91 : vector<64x128xf32>
    %cst_95 = arith.constant 0.000000e+00 : f32
    %93 = vector.broadcast %cst_95 : f32 to vector<64x128xf32>
    %94 = arith.maximumf %92, %93 : vector<64x128xf32>
    %c0_96 = arith.constant 0 : index
    %c0_97 = arith.constant 0 : index
    %c0_98 = arith.constant 0 : index
    %95 = vector.load %arg10[%c0_96, %c0_97, %c0_98] : memref<1x64x128xf32, #tpu.memory_space<vmem>>, vector<1x64x128xf32>
    %96 = vector.shape_cast %95 : vector<1x64x128xf32> to vector<64x128xf32>
    %97 = vector.shape_cast %94 : vector<64x128xf32> to vector<1x64x128xf32>
    tpu.vector_store %arg10[%c0_96, %c0_97, %c0_98], %97 {strides = array<i32>} : memref<1x64x128xf32, #tpu.memory_space<vmem>>, vector<1x64x128xf32>,
    return
  }
  func.func @transform_0(%arg0: i32) -> (i32, i32, i32, i32) {
    %c0_i32 = arith.constant 0 : i32
    %c0_i32_0 = arith.constant 0 : i32
    %c0_i32_1 = arith.constant 0 : i32
    %c0_i32_2 = arith.constant 0 : i32
    return %arg0, %c0_i32, %c0_i32_0, %c0_i32_1 : i32, i32, i32, i32
  }
  func.func @transform_1(%arg0: i32) -> (i32, i32, i32, i32) {
    %c0_i32 = arith.constant 0 : i32
    %c0_i32_0 = arith.constant 0 : i32
    %c0_i32_1 = arith.constant 0 : i32
    %c0_i32_2 = arith.constant 0 : i32
    %c0_i32_3 = arith.constant 0 : i32
    return %c0_i32, %c0_i32_0, %c0_i32_1, %c0_i32_2 : i32, i32, i32, i32
  }
  func.func @transform_2(%arg0: i32) -> (i32, i32) {
    %c0_i32 = arith.constant 0 : i32
    %c0_i32_0 = arith.constant 0 : i32
    %c0_i32_1 = arith.constant 0 : i32
    return %c0_i32, %c0_i32_0 : i32, i32
  }
  func.func @transform_3(%arg0: i32) -> (i32, i32) {
    %c0_i32 = arith.constant 0 : i32
    %c0_i32_0 = arith.constant 0 : i32
    %c0_i32_1 = arith.constant 0 : i32
    return %c0_i32, %c0_i32_0 : i32, i32
  }
  func.func @transform_4(%arg0: i32) -> (i32, i32, i32) {
    %c0_i32 = arith.constant 0 : i32
    %c0_i32_0 = arith.constant 0 : i32
    %c0_i32_1 = arith.constant 0 : i32
    %c0_i32_2 = arith.constant 0 : i32
    return %c0_i32, %c0_i32_0, %c0_i32_1 : i32, i32, i32
  }
  func.func @transform_5(%arg0: i32) -> (i32, i32) {
    %c0_i32 = arith.constant 0 : i32
    %c0_i32_0 = arith.constant 0 : i32
    %c0_i32_1 = arith.constant 0 : i32
    return %c0_i32, %c0_i32_0 : i32, i32
  }
  func.func @transform_6(%arg0: i32) -> (i32, i32) {
    %c0_i32 = arith.constant 0 : i32
    %c0_i32_0 = arith.constant 0 : i32
    %c0_i32_1 = arith.constant 0 : i32
    return %c0_i32, %c0_i32_0 : i32, i32
  }
  func.func @transform_7(%arg0: i32) -> (i32, i32) {
    %c0_i32 = arith.constant 0 : i32
    %c0_i32_0 = arith.constant 0 : i32
    %c0_i32_1 = arith.constant 0 : i32
    return %c0_i32, %c0_i32_0 : i32, i32
  }
  func.func @transform_8(%arg0: i32) -> (i32, i32) {
    %c0_i32 = arith.constant 0 : i32
    %c0_i32_0 = arith.constant 0 : i32
    %c0_i32_1 = arith.constant 0 : i32
    return %c0_i32, %c0_i32_0 : i32, i32
  }
  func.func @transform_9(%arg0: i32) -> (i32, i32, i32) {
    %c0_i32 = arith.constant 0 : i32
    %c0_i32_0 = arith.constant 0 : i32
    %c0_i32_1 = arith.constant 0 : i32
    return %arg0, %c0_i32, %c0_i32_0 : i32, i32, i32
  }
}

</mosaic_0001>

<llo_original>
// kernel: tpu_custom_call.1
$region0: #{tpu_custom_call.1}
  #allocation0 [shape = 'u32[]', space=smem, size = 0x4, offset = 0x4, fixed_abs, tag = 'smem constant byte address 0x4 - core index']
  #allocation1 [shape = 'u32[72,128]{1,0:T(1,128)}', space=vmem, size = 0x9000, scoped, tag = 'internal scratch']
  #allocation2 [shape = 'f32[4,9,16,128]{3,2,1,0:T(8,128)}', space=vmem, size = 0x48000, scoped, tag = 'scratch operand']
  %s0 = inlined_call_operand.hbm [shape: f32[8,9,16,128], index: 0, kind: input, shape index: {}]
  %s1 = inlined_call_operand.vmem [shape: f32[4,9,16,1], index: 1, kind: input, shape index: {}]
  %s2 = inlined_call_operand.vmem [shape: f32[128,128], index: 2, kind: input, shape index: {}]
  %s3 = inlined_call_operand.vmem [shape: f32[1,128], index: 3, kind: input, shape index: {}]
  %s4 = inlined_call_operand.hbm [shape: f32[9,128,128], index: 4, kind: input, shape index: {}]
  %s5 = inlined_call_operand.vmem [shape: f32[1,128], index: 5, kind: input, shape index: {}]
  %s6 = inlined_call_operand.vmem [shape: f32[128,128], index: 6, kind: input, shape index: {}]
  %s7 = inlined_call_operand.vmem [shape: f32[128,128], index: 7, kind: input, shape index: {}]
  %s8 = inlined_call_operand.vmem [shape: f32[1,128], index: 8, kind: input, shape index: {}]
  %s9 = inlined_call_operand.hbm [shape: f32[2,64,128], index: 9, kind: output, shape index: {}]
  %s10 = sld [smem:[#allocation0]]
  $region77: #{tpu_custom_call.1} parent=0
    _
  %s12 = ssub.s32 1, %s10
  %s13 = scalar_select 0, %s12, %s10
  $region1: #{tpu_custom_call.1} parent=0
    #allocation3 [shape = 'u8[589824]{0}', space=vmem, size = 0x90000, scoped, tag = 'input window, operand 0']
    #allocation4 [shape = 's32[2]{0}', space=sflag, size = 0x8, scoped, tag = 'scoped memory for tpu_custom_call.1']
    #allocation5 [shape = 's32[2]{0}', space=sflag, size = 0x8, scoped, tag = 'scoped memory for tpu_custom_call.1']
    #allocation6 [shape = 'u8[589824]{0}', space=vmem, size = 0x90000, scoped, tag = 'input window, operand 4, single buffered']
    #allocation7 [shape = 's32[1]{0}', space=sflag, size = 0x4, scoped, tag = 'scoped memory for tpu_custom_call.1']
    #allocation8 [shape = 'u8[65536]{0}', space=vmem, size = 0x10000, scoped, tag = 'output window, operand 0']
    %14 = vsyncpa [#allocation4], 0
    %s15 = scalar_lea.sflag [#allocation4], 1
    %16 = vsyncpa %s15, 0
    %17 = vsyncpa [#allocation7], 0
    %18 = vsyncpa [#allocation5], 0
    %s19 = scalar_lea.sflag [#allocation5], 1
    %20 = vsyncpa %s19, 0
    loop: start=0, step=1, limit=4
    $region2: #{tpu_custom_call.1} parent=1 // loop_pre_header
      _
    $region3: #{tpu_custom_call.1} parent=1 // loop_header
      %s22 = sphi 0, %s26
      %p23 = scmp.ge.s32.totalorder %s22, 4
      %s32 = sphi 0, %s34
      %s35 = sphi 0, %s32
      %s36 = sphi 0, %s35
      %s52 = sphi 0, %s36
      %s56 = sphi 0, %s56
      %s58 = sphi 0, %s56
      %s59 = sphi 0, %s58
      %s73 = sphi 0, %s59
      %s77 = sphi 0, %s77
      %s79 = sphi 0, %s77
      %s80 = sphi 0, %s79
      %s94 = sphi 0, %s80
      %s98 = sphi 0, %s98
      %s100 = sphi 0, %s98
      %s101 = sphi 0, %s100
      %s115 = sphi 0, %s101
      %s119 = sphi 0, %s119
      %s121 = sphi 0, %s119
      %s122 = sphi 0, %s121
      %s136 = sphi 0, %s122
      %s140 = sphi 0, %s140
      %s142 = sphi 0, %s140
      %s143 = sphi 0, %s142
      %s157 = sphi 0, %s143
      %s161 = sphi 0, %s161
      %s163 = sphi 0, %s161
      %s164 = sphi 0, %s163
      %s178 = sphi 0, %s164
      %s182 = sphi 0, %s182
      %s184 = sphi 0, %s182
      %s185 = sphi 0, %s184
      %s199 = sphi 0, %s185
      %s203 = sphi 0, %s203
      %s205 = sphi 0, %s203
      %s206 = sphi 0, %s205
      %s220 = sphi 0, %s206
      %s226 = sphi 0, %s228
      %s229 = sphi 0, %s226
      %s230 = sphi 0, %s229
      %s246 = sphi 0, %s230
    $region4: #{tpu_custom_call.1} parent=1 // loop_header_branch
      %25 = sbr.rel (%p23) target = $region8
    $region5: #{tpu_custom_call.1} parent=1 // loop_body
      %s27 = ssub.s32 %s22, 1
      %s28 = ssub.s32 %s22, 2
      %s29 = sadd.s32 %s22, 1
      %s30 = ssub.s32 %s22, %s29
      %p31 = scmp.eq.s32.totalorder %s30, 0
      %s33 = sadd.s32 %s32, 1
      %s34 = scalar_select %p31, %s32, %s33
      %p37 = pneg %p31
      %p38 = scmp.eq.s32.totalorder %s22, 1
      %p39 = por %p37, %p38
      %p40 = scmp.ne.s32.totalorder %s32, %s35
      %p41 = scmp.eq.s32.totalorder %s22, 0
      %p42 = por %p40, %p41
      %p43 = scmp.ne.s32.totalorder %s32, %s35
      %p44 = scmp.eq.s32.totalorder %s27, 1
      %p45 = por %p43, %p44
      %p46 = scmp.ne.s32.totalorder %s35, %s36
      %p47 = scmp.eq.s32.totalorder %s27, 0
      %p48 = por %p46, %p47
      %p49 = scmp.ne.s32.totalorder %s35, %s36
      %p50 = scmp.eq.s32.totalorder %s28, 1
      %p51 = por %p49, %p50
      %p53 = scmp.ne.s32.totalorder %s36, %s52
      %p54 = scmp.eq.s32.totalorder %s28, 0
      %p55 = por %p53, %p54
      %s57 = sadd.s32 %s56, 1
      %p60 = scmp.eq.s32.totalorder %s22, 1
      %p61 = scmp.ne.s32.totalorder %s56, %s58
      %p62 = scmp.eq.s32.totalorder %s22, 0
      %p63 = por %p61, %p62
      %p64 = scmp.ne.s32.totalorder %s56, %s58
      %p65 = scmp.eq.s32.totalorder %s27, 1
      %p66 = por %p64, %p65
      %p67 = scmp.ne.s32.totalorder %s58, %s59
      %p68 = scmp.eq.s32.totalorder %s27, 0
      %p69 = por %p67, %p68
      %p70 = scmp.ne.s32.totalorder %s58, %s59
      %p71 = scmp.eq.s32.totalorder %s28, 1
      %p72 = por %p70, %p71
      %p74 = scmp.ne.s32.totalorder %s59, %s73
      %p75 = scmp.eq.s32.totalorder %s28, 0
      %p76 = por %p74, %p75
      %s78 = sadd.s32 %s77, 1
      %p81 = scmp.eq.s32.totalorder %s22, 1
      %p82 = scmp.ne.s32.totalorder %s77, %s79
      %p83 = scmp.eq.s32.totalorder %s22, 0
      %p84 = por %p82, %p83
      %p85 = scmp.ne.s32.totalorder %s77, %s79
      %p86 = scmp.eq.s32.totalorder %s27, 1
      %p87 = por %p85, %p86
      %p88 = scmp.ne.s32.totalorder %s79, %s80
      %p89 = scmp.eq.s32.totalorder %s27, 0
      %p90 = por %p88, %p89
      %p91 = scmp.ne.s32.totalorder %s79, %s80
      %p92 = scmp.eq.s32.totalorder %s28, 1
      %p93 = por %p91, %p92
      %p95 = scmp.ne.s32.totalorder %s80, %s94
      %p96 = scmp.eq.s32.totalorder %s28, 0
      %p97 = por %p95, %p96
      %s99 = sadd.s32 %s98, 1
      %p102 = scmp.eq.s32.totalorder %s22, 1
      %p103 = scmp.ne.s32.totalorder %s98, %s100
      %p104 = scmp.eq.s32.totalorder %s22, 0
      %p105 = por %p103, %p104
      %p106 = scmp.ne.s32.totalorder %s98, %s100
      %p107 = scmp.eq.s32.totalorder %s27, 1
      %p108 = por %p106, %p107
      %p109 = scmp.ne.s32.totalorder %s100, %s101
      %p110 = scmp.eq.s32.totalorder %s27, 0
      %p111 = por %p109, %p110
      %p112 = scmp.ne.s32.totalorder %s100, %s101
      %p113 = scmp.eq.s32.totalorder %s28, 1
      %p114 = por %p112, %p113
      %p116 = scmp.ne.s32.totalorder %s101, %s115
      %p117 = scmp.eq.s32.totalorder %s28, 0
      %p118 = por %p116, %p117
      %s120 = sadd.s32 %s119, 1
      %p123 = scmp.eq.s32.totalorder %s22, 1
      %p124 = scmp.ne.s32.totalorder %s119, %s121
      %p125 = scmp.eq.s32.totalorder %s22, 0
      %p126 = por %p124, %p125
      %p127 = scmp.ne.s32.totalorder %s119, %s121
      %p128 = scmp.eq.s32.totalorder %s27, 1
      %p129 = por %p127, %p128
      %p130 = scmp.ne.s32.totalorder %s121, %s122
      %p131 = scmp.eq.s32.totalorder %s27, 0
      %p132 = por %p130, %p131
      %p133 = scmp.ne.s32.totalorder %s121, %s122
      %p134 = scmp.eq.s32.totalorder %s28, 1
      %p135 = por %p133, %p134
      %p137 = scmp.ne.s32.totalorder %s122, %s136
      %p138 = scmp.eq.s32.totalorder %s28, 0
      %p139 = por %p137, %p138
      %s141 = sadd.s32 %s140, 1
      %p144 = scmp.eq.s32.totalorder %s22, 1
      %p145 = scmp.ne.s32.totalorder %s140, %s142
      %p146 = scmp.eq.s32.totalorder %s22, 0
      %p147 = por %p145, %p146
      %p148 = scmp.ne.s32.totalorder %s140, %s142
      %p149 = scmp.eq.s32.totalorder %s27, 1
      %p150 = por %p148, %p149
      %p151 = scmp.ne.s32.totalorder %s142, %s143
      %p152 = scmp.eq.s32.totalorder %s27, 0
      %p153 = por %p151, %p152
      %p154 = scmp.ne.s32.totalorder %s142, %s143
      %p155 = scmp.eq.s32.totalorder %s28, 1
      %p156 = por %p154, %p155
      %p158 = scmp.ne.s32.totalorder %s143, %s157
      %p159 = scmp.eq.s32.totalorder %s28, 0
      %p160 = por %p158, %p159
      %s162 = sadd.s32 %s161, 1
      %p165 = scmp.eq.s32.totalorder %s22, 1
      %p166 = scmp.ne.s32.totalorder %s161, %s163
      %p167 = scmp.eq.s32.totalorder %s22, 0
      %p168 = por %p166, %p167
      %p169 = scmp.ne.s32.totalorder %s161, %s163
      %p170 = scmp.eq.s32.totalorder %s27, 1
      %p171 = por %p169, %p170
      %p172 = scmp.ne.s32.totalorder %s163, %s164
      %p173 = scmp.eq.s32.totalorder %s27, 0
      %p174 = por %p172, %p173
      %p175 = scmp.ne.s32.totalorder %s163, %s164
      %p176 = scmp.eq.s32.totalorder %s28, 1
      %p177 = por %p175, %p176
      %p179 = scmp.ne.s32.totalorder %s164, %s178
      %p180 = scmp.eq.s32.totalorder %s28, 0
      %p181 = por %p179, %p180
      %s183 = sadd.s32 %s182, 1
      %p186 = scmp.eq.s32.totalorder %s22, 1
      %p187 = scmp.ne.s32.totalorder %s182, %s184
      %p188 = scmp.eq.s32.totalorder %s22, 0
      %p189 = por %p187, %p188
      %p190 = scmp.ne.s32.totalorder %s182, %s184
      %p191 = scmp.eq.s32.totalorder %s27, 1
      %p192 = por %p190, %p191
      %p193 = scmp.ne.s32.totalorder %s184, %s185
      %p194 = scmp.eq.s32.totalorder %s27, 0
      %p195 = por %p193, %p194
      %p196 = scmp.ne.s32.totalorder %s184, %s185
      %p197 = scmp.eq.s32.totalorder %s28, 1
      %p198 = por %p196, %p197
      %p200 = scmp.ne.s32.totalorder %s185, %s199
      %p201 = scmp.eq.s32.totalorder %s28, 0
      %p202 = por %p200, %p201
      %s204 = sadd.s32 %s203, 1
      %p207 = scmp.eq.s32.totalorder %s22, 1
      %p208 = scmp.ne.s32.totalorder %s203, %s205
      %p209 = scmp.eq.s32.totalorder %s22, 0
      %p210 = por %p208, %p209
      %p211 = scmp.ne.s32.totalorder %s203, %s205
      %p212 = scmp.eq.s32.totalorder %s27, 1
      %p213 = por %p211, %p212
      %p214 = scmp.ne.s32.totalorder %s205, %s206
      %p215 = scmp.eq.s32.totalorder %s27, 0
      %p216 = por %p214, %p215
      %p217 = scmp.ne.s32.totalorder %s205, %s206
      %p218 = scmp.eq.s32.totalorder %s28, 1
      %p219 = por %p217, %p218
      %p221 = scmp.ne.s32.totalorder %s206, %s220
      %p222 = scmp.eq.s32.totalorder %s28, 0
      %p223 = por %p221, %p222
      %s224 = ssub.s32 %s22, %s29
      %p225 = scmp.eq.s32.totalorder %s224, 0
      %s227 = sadd.s32 %s226, 1
      %s228 = scalar_select %p225, %s226, %s227
      %p231 = pneg %p225
      %p232 = scmp.eq.s32.totalorder %s22, 1
      %p233 = por %p231, %p232
      %p234 = scmp.ne.s32.totalorder %s226, %s229
      %p235 = scmp.eq.s32.totalorder %s22, 0
      %p236 = por %p234, %p235
      %p237 = scmp.ne.s32.totalorder %s226, %s229
      %p238 = scmp.eq.s32.totalorder %s27, 1
      %p239 = por %p237, %p238
      %p240 = scmp.ne.s32.totalorder %s229, %s230
      %p241 = scmp.eq.s32.totalorder %s27, 0
      %p242 = por %p240, %p241
      %p243 = scmp.ne.s32.totalorder %s229, %s230
      %p244 = scmp.eq.s32.totalorder %s28, 1
      %p245 = por %p243, %p244
      %p247 = scmp.ne.s32.totalorder %s230, %s246
      %p248 = scmp.eq.s32.totalorder %s28, 0
      %p249 = por %p247, %p248
      %p250 = scmp.le.s32.totalorder 1, %s22
      %p251 = scmp.lt.s32.totalorder %s22, 3
      %p252 = pnand %p250, %p251
      %p253 = pneg %p252
      // Predicated region
      $region9: #{tpu_custom_call.1} parent=5 // pred_check
        _
      $region10: #{tpu_custom_call.1} parent=5 // pred_check_branch
        %255 = sbr.rel (%p252) target = $region12
      $region11: #{tpu_custom_call.1} parent=5 // pred_region
        %s256 = ssub.s32 %s22, 1
        // Predicated region
        $region13: #{tpu_custom_call.1} parent=11 // pred_check
          %p257 = pneg %p69
        $region14: #{tpu_custom_call.1} parent=11 // pred_check_branch
          %259 = sbr.rel (%p257) target = $region16
        $region15: #{tpu_custom_call.1} parent=11 // pred_region
          _
        $region16: #{tpu_custom_call.1} parent=11 // pred_fallthru
          _
        // Predicated region
        $region17: #{tpu_custom_call.1} parent=11 // pred_check
          %p260 = pneg %p90
        $region18: #{tpu_custom_call.1} parent=11 // pred_check_branch
          %262 = sbr.rel (%p260) target = $region20
        $region19: #{tpu_custom_call.1} parent=11 // pred_region
          _
        $region20: #{tpu_custom_call.1} parent=11 // pred_fallthru
          _
        // Predicated region
        $region21: #{tpu_custom_call.1} parent=11 // pred_check
          %p263 = pneg %p111
        $region22: #{tpu_custom_call.1} parent=11 // pred_check_branch
          %265 = sbr.rel (%p263) target = $region24
        $region23: #{tpu_custom_call.1} parent=11 // pred_region
          _
        $region24: #{tpu_custom_call.1} parent=11 // pred_fallthru
          _
        // Predicated region
        $region25: #{tpu_custom_call.1} parent=11 // pred_check
          %p266 = pneg %p132
        $region26: #{tpu_custom_call.1} parent=11 // pred_check_branch
          %268 = sbr.rel (%p266) target = $region28
        $region27: #{tpu_custom_call.1} parent=11 // pred_region
          %270 = vsyncadd [#allocation7], 0
          %s271 = sshll.u32 %s4, 4
          %s272 = int_to_ptr.hbm [resolvable:$true] %s271
          %s273 = sshll.u32 [#allocation6], 4
          %s274 = int_to_ptr.vmem [resolvable:$true] %s273
          %279 = dma.hbm_to_vmem [thread:$0]  %s272, 18432, %s274, [#allocation7], 128, 128, 8
        $region28: #{tpu_custom_call.1} parent=11 // pred_fallthru
          _
        // Predicated region
        $region29: #{tpu_custom_call.1} parent=11 // pred_check
          %p280 = pneg %p153
        $region30: #{tpu_custom_call.1} parent=11 // pred_check_branch
          %282 = sbr.rel (%p280) target = $region32
        $region31: #{tpu_custom_call.1} parent=11 // pred_region
          _
        $region32: #{tpu_custom_call.1} parent=11 // pred_fallthru
          _
        // Predicated region
        $region33: #{tpu_custom_call.1} parent=11 // pred_check
          %p283 = pneg %p174
        $region34: #{tpu_custom_call.1} parent=11 // pred_check_branch
          %285 = sbr.rel (%p283) target = $region36
        $region35: #{tpu_custom_call.1} parent=11 // pred_region
          _
        $region36: #{tpu_custom_call.1} parent=11 // pred_fallthru
          _
        // Predicated region
        $region37: #{tpu_custom_call.1} parent=11 // pred_check
          %p286 = pneg %p195
        $region38: #{tpu_custom_call.1} parent=11 // pred_check_branch
          %288 = sbr.rel (%p286) target = $region40
        $region39: #{tpu_custom_call.1} parent=11 // pred_region
          _
        $region40: #{tpu_custom_call.1} parent=11 // pred_fallthru
          _
        // Predicated region
        $region41: #{tpu_custom_call.1} parent=11 // pred_check
          %p289 = pneg %p216
        $region42: #{tpu_custom_call.1} parent=11 // pred_check_branch
          %291 = sbr.rel (%p289) target = $region44
        $region43: #{tpu_custom_call.1} parent=11 // pred_region
          _
        $region44: #{tpu_custom_call.1} parent=11 // pred_fallthru
          _
      $region12: #{tpu_custom_call.1} parent=5 // pred_fallthru
        _
      %p292 = scmp.lt.s32.totalorder %s22, 2
      // Predicated region
      $region45: #{tpu_custom_call.1} parent=5 // pred_check
        %p293 = pneg %p292
      $region46: #{tpu_custom_call.1} parent=5 // pred_check_branch
        %295 = sbr.rel (%p293) target = $region48
      $region47: #{tpu_custom_call.1} parent=5 // pred_region
        // Predicated region
        $region49: #{tpu_custom_call.1} parent=47 // pred_check
          %p296 = pneg %p42
        $region50: #{tpu_custom_call.1} parent=47 // pred_check_branch
          %298 = sbr.rel (%p296) target = $region52
        $region51: #{tpu_custom_call.1} parent=47 // pred_region
          %s299 = sand.u32 %s32, 1
          %s300 = scalar_lea.sflag [#allocation4], %s299
          %s301 = sand.u32 %s32, 1
          %s302 = smul.addr %s301, 576
          %s303 = scalar_lea.vmem [#allocation3], %s302
          %s304 = smul.u32 4, %s22
          %306 = vsyncadd %s300, 0
          %s307 = smul.addr %s304, 18
          %s308 = smul.addr %s307, 8
          %s309 = scalar_lea.hbm %s0, %s308
          %s310 = sshll.u32 %s309, 4
          %s311 = int_to_ptr.hbm [resolvable:$true] %s310
          %s312 = sshll.u32 %s303, 4
          %s313 = int_to_ptr.vmem [resolvable:$true] %s312
          %318 = dma.hbm_to_vmem [thread:$0]  %s311, 9216, %s313, %s300, 128, 128, 8
        $region52: #{tpu_custom_call.1} parent=47 // pred_fallthru
          _
      $region48: #{tpu_custom_call.1} parent=5 // pred_fallthru
        _
      %p319 = scmp.le.s32.totalorder 1, %s22
      %p320 = scmp.lt.s32.totalorder %s22, 3
      %p321 = pnand %p319, %p320
      %p322 = pneg %p321
      // Predicated region
      $region53: #{tpu_custom_call.1} parent=5 // pred_check
        _
      $region54: #{tpu_custom_call.1} parent=5 // pred_check_branch
        %324 = sbr.rel (%p321) target = $region56
      $region55: #{tpu_custom_call.1} parent=5 // pred_region
        %s325 = ssub.s32 %s22, 1
        %s326 = sand.u32 %s35, 1
        %s327 = scalar_lea.sflag [#allocation4], %s326
        %s328 = sand.u32 %s35, 1
        %s329 = smul.addr %s328, 576
        %s330 = scalar_lea.vmem [#allocation3], %s329
        // Predicated region
        $region57: #{tpu_custom_call.1} parent=55 // pred_check
          %p331 = pneg %p48
        $region58: #{tpu_custom_call.1} parent=55 // pred_check_branch
          %333 = sbr.rel (%p331) target = $region60
        $region59: #{tpu_custom_call.1} parent=55 // pred_region
          %335 = dma.done %s327, 9216
        $region60: #{tpu_custom_call.1} parent=55 // pred_fallthru
          _
        // Predicated region
        $region61: #{tpu_custom_call.1} parent=55 // pred_check
          %p336 = pneg %p132
        $region62: #{tpu_custom_call.1} parent=55 // pred_check_branch
          %338 = sbr.rel (%p336) target = $region64
        $region63: #{tpu_custom_call.1} parent=55 // pred_region
          %340 = dma.done [#allocation7], 18432
        $region64: #{tpu_custom_call.1} parent=55 // pred_fallthru
          _
        %s341 = sand.u32 %s35, 1
        %s342 = scalar_lea.sflag [#allocation4], %s341
        %s343 = sand.u32 %s35, 1
        %s344 = smul.addr %s343, 576
        %s345 = scalar_lea.vmem [#allocation3], %s344
        %p346 = pneg %p48
        %p347 = pneg %p45
        %p348 = pneg %p69
        %p349 = pneg %p66
        %p350 = pneg %p90
        %p351 = pneg %p87
        %p352 = pneg %p111
        %p353 = pneg %p108
        %p354 = pneg %p132
        %p355 = pneg %p129
        %p356 = pneg %p153
        %p357 = pneg %p150
        %p358 = pneg %p174
        %p359 = pneg %p171
        %p360 = pneg %p195
        %p361 = pneg %p192
        %p362 = pneg %p216
        %p363 = pneg %p213
        %p364 = pneg %p242
        %p365 = pneg %p239
        %s366 = sand.u32 %s229, 1
        %s367 = scalar_lea.sflag [#allocation5], %s366
        %s368 = sand.u32 %s229, 1
        %s369 = smul.addr %s368, 64
        %s370 = scalar_lea.vmem [#allocation8], %s369
        %s371 = smul.u32 4, %s27
        %v372 = vld [vmem:[%s330] sm:$0xff]
        %v373 = vld [vmem:[%s330 + $0x8] sm:$0xff]
        %v374 = vld [vmem:[%s330 + $0x10] sm:$0xff]
        %v375 = vld [vmem:[%s330 + $0x18] sm:$0xff]
        %v376 = vld [vmem:[%s330 + $0x20] sm:$0xff]
        %v377 = vld [vmem:[%s330 + $0x28] sm:$0xff]
        %v378 = vld [vmem:[%s330 + $0x30] sm:$0xff]
        %v379 = vld [vmem:[%s330 + $0x38] sm:$0xff]
        %v380 = vld [vmem:[%s330 + $0x40] sm:$0xff]
        %v381 = vld [vmem:[%s330 + $0x48] sm:$0xff]
        %v382 = vld [vmem:[%s330 + $0x50] sm:$0xff]
        %v383 = vld [vmem:[%s330 + $0x58] sm:$0xff]
        %v384 = vld [vmem:[%s330 + $0x60] sm:$0xff]
        %v385 = vld [vmem:[%s330 + $0x68] sm:$0xff]
        %v386 = vld [vmem:[%s330 + $0x70] sm:$0xff]
        %v387 = vld [vmem:[%s330 + $0x78] sm:$0xff]
        %v388 = vld [vmem:[%s330 + $0x80] sm:$0xff]
        %v389 = vld [vmem:[%s330 + $0x88] sm:$0xff]
        %v390 = vld [vmem:[%s330 + $0x90] sm:$0xff]
        %v391 = vld [vmem:[%s330 + $0x98] sm:$0xff]
        %v392 = vld [vmem:[%s330 + $0xa0] sm:$0xff]
        %v393 = vld [vmem:[%s330 + $0xa8] sm:$0xff]
        %v394 = vld [vmem:[%s330 + $0xb0] sm:$0xff]
        %v395 = vld [vmem:[%s330 + $0xb8] sm:$0xff]
        %v396 = vld [vmem:[%s330 + $0xc0] sm:$0xff]
        %v397 = vld [vmem:[%s330 + $0xc8] sm:$0xff]
        %v398 = vld [vmem:[%s330 + $0xd0] sm:$0xff]
        %v399 = vld [vmem:[%s330 + $0xd8] sm:$0xff]
        %v400 = vld [vmem:[%s330 + $0xe0] sm:$0xff]
        %v401 = vld [vmem:[%s330 + $0xe8] sm:$0xff]
        %v402 = vld [vmem:[%s330 + $0xf0] sm:$0xff]
        %v403 = vld [vmem:[%s330 + $0xf8] sm:$0xff]
        %v404 = vld [vmem:[%s330 + $0x100] sm:$0xff]
        %v405 = vld [vmem:[%s330 + $0x108] sm:$0xff]
        %v406 = vld [vmem:[%s330 + $0x110] sm:$0xff]
        %v407 = vld [vmem:[%s330 + $0x118] sm:$0xff]
        %v408 = vld [vmem:[%s330 + $0x120] sm:$0xff]
        %v409 = vld [vmem:[%s330 + $0x128] sm:$0xff]
        %v410 = vld [vmem:[%s330 + $0x130] sm:$0xff]
        %v411 = vld [vmem:[%s330 + $0x138] sm:$0xff]
        %v412 = vld [vmem:[%s330 + $0x140] sm:$0xff]
        %v413 = vld [vmem:[%s330 + $0x148] sm:$0xff]
        %v414 = vld [vmem:[%s330 + $0x150] sm:$0xff]
        %v415 = vld [vmem:[%s330 + $0x158] sm:$0xff]
        %v416 = vld [vmem:[%s330 + $0x160] sm:$0xff]
        %v417 = vld [vmem:[%s330 + $0x168] sm:$0xff]
        %v418 = vld [vmem:[%s330 + $0x170] sm:$0xff]
        %v419 = vld [vmem:[%s330 + $0x178] sm:$0xff]
        %v420 = vld [vmem:[%s330 + $0x180] sm:$0xff]
        %v421 = vld [vmem:[%s330 + $0x188] sm:$0xff]
        %v422 = vld [vmem:[%s330 + $0x190] sm:$0xff]
        %v423 = vld [vmem:[%s330 + $0x198] sm:$0xff]
        %v424 = vld [vmem:[%s330 + $0x1a0] sm:$0xff]
        %v425 = vld [vmem:[%s330 + $0x1a8] sm:$0xff]
        %v426 = vld [vmem:[%s330 + $0x1b0] sm:$0xff]
        %v427 = vld [vmem:[%s330 + $0x1b8] sm:$0xff]
        %v428 = vld [vmem:[%s330 + $0x1c0] sm:$0xff]
        %v429 = vld [vmem:[%s330 + $0x1c8] sm:$0xff]
        %v430 = vld [vmem:[%s330 + $0x1d0] sm:$0xff]
        %v431 = vld [vmem:[%s330 + $0x1d8] sm:$0xff]
        %v432 = vld [vmem:[%s330 + $0x1e0] sm:$0xff]
        %v433 = vld [vmem:[%s330 + $0x1e8] sm:$0xff]
        %v434 = vld [vmem:[%s330 + $0x1f0] sm:$0xff]
        %v435 = vld [vmem:[%s330 + $0x1f8] sm:$0xff]
        %v436 = vld [vmem:[%s330 + $0x200] sm:$0xff]
        %v437 = vld [vmem:[%s330 + $0x208] sm:$0xff]
        %v438 = vld [vmem:[%s330 + $0x210] sm:$0xff]
        %v439 = vld [vmem:[%s330 + $0x218] sm:$0xff]
        %v440 = vld [vmem:[%s330 + $0x220] sm:$0xff]
        %v441 = vld [vmem:[%s330 + $0x228] sm:$0xff]
        %v442 = vld [vmem:[%s330 + $0x230] sm:$0xff]
        %v443 = vld [vmem:[%s330 + $0x238] sm:$0xff]
        %v444 = vld [vmem:[%s2] sm:$0xff]
        %v445 = vld [vmem:[%s2 + $0x8] sm:$0xff]
        %v446 = vld [vmem:[%s2 + $0x10] sm:$0xff]
        %v447 = vld [vmem:[%s2 + $0x18] sm:$0xff]
        %v448 = vld [vmem:[%s2 + $0x20] sm:$0xff]
        %v449 = vld [vmem:[%s2 + $0x28] sm:$0xff]
        %v450 = vld [vmem:[%s2 + $0x30] sm:$0xff]
        %v451 = vld [vmem:[%s2 + $0x38] sm:$0xff]
        %v452 = vld [vmem:[%s2 + $0x40] sm:$0xff]
        %v453 = vld [vmem:[%s2 + $0x48] sm:$0xff]
        %v454 = vld [vmem:[%s2 + $0x50] sm:$0xff]
        %v455 = vld [vmem:[%s2 + $0x58] sm:$0xff]
        %v456 = vld [vmem:[%s2 + $0x60] sm:$0xff]
        %v457 = vld [vmem:[%s2 + $0x68] sm:$0xff]
        %v458 = vld [vmem:[%s2 + $0x70] sm:$0xff]
        %v459 = vld [vmem:[%s2 + $0x78] sm:$0xff]
        %v460 = vld [vmem:[%s3] sm:$0x1]
        %v462 = vperm.slane %v460, 0
        %464 = vmatpush.msra.mxu0 %v459
        %465 = vmatpush.msra.mxu0 %v458
        %466 = vmatpush.msra.mxu0 %v457
        %467 = vmatpush.msra.mxu0 %v456
        %468 = vmatpush.msra.mxu0 %v455
        %469 = vmatpush.msra.mxu0 %v454
        %470 = vmatpush.msra.mxu0 %v453
        %471 = vmatpush.msra.mxu0 %v452
        %472 = vmatpush.msra.mxu0 %v451
        %473 = vmatpush.msra.mxu0 %v450
        %474 = vmatpush.msra.mxu0 %v449
        %475 = vmatpush.msra.mxu0 %v448
        %476 = vmatpush.msra.mxu0 %v447
        %477 = vmatpush.msra.mxu0 %v446
        %478 = vmatpush.msra.mxu0 %v445
        %479 = vmatpush.msra.mxu0 %v444
        %480 = vmatmul.f32.gmra.mxu0 %v372
        %v481 = vpop.f32.mrf.mxu0
        %v482 = vadd.f32 %v462, %v481
        %483 = vmatmul.f32.gmra.mxu0 %v373
        %v484 = vpop.f32.mrf.mxu0
        %v485 = vadd.f32 %v462, %v484
        %486 = vmatmul.f32.gmra.mxu0 %v374
        %v487 = vpop.f32.mrf.mxu0
        %v488 = vadd.f32 %v462, %v487
        %489 = vmatmul.f32.gmra.mxu0 %v375
        %v490 = vpop.f32.mrf.mxu0
        %v491 = vadd.f32 %v462, %v490
        %492 = vmatmul.f32.gmra.mxu0 %v376
        %v493 = vpop.f32.mrf.mxu0
        %v494 = vadd.f32 %v462, %v493
        %495 = vmatmul.f32.gmra.mxu0 %v377
        %v496 = vpop.f32.mrf.mxu0
        %v497 = vadd.f32 %v462, %v496
        %498 = vmatmul.f32.gmra.mxu0 %v378
        %v499 = vpop.f32.mrf.mxu0
        %v500 = vadd.f32 %v462, %v499
        %501 = vmatmul.f32.gmra.mxu0 %v379
        %v502 = vpop.f32.mrf.mxu0
        %v503 = vadd.f32 %v462, %v502
        %504 = vmatmul.f32.gmra.mxu0 %v380
        %v505 = vpop.f32.mrf.mxu0
        %v506 = vadd.f32 %v462, %v505
        %507 = vmatmul.f32.gmra.mxu0 %v381
        %v508 = vpop.f32.mrf.mxu0
        %v509 = vadd.f32 %v462, %v508
        %510 = vmatmul.f32.gmra.mxu0 %v382
        %v511 = vpop.f32.mrf.mxu0
        %v512 = vadd.f32 %v462, %v511
        %513 = vmatmul.f32.gmra.mxu0 %v383
        %v514 = vpop.f32.mrf.mxu0
        %v515 = vadd.f32 %v462, %v514
        %516 = vmatmul.f32.gmra.mxu0 %v384
        %v517 = vpop.f32.mrf.mxu0
        %v518 = vadd.f32 %v462, %v517
        %519 = vmatmul.f32.gmra.mxu0 %v385
        %v520 = vpop.f32.mrf.mxu0
        %v521 = vadd.f32 %v462, %v520
        %522 = vmatmul.f32.gmra.mxu0 %v386
        %v523 = vpop.f32.mrf.mxu0
        %v524 = vadd.f32 %v462, %v523
        %525 = vmatmul.f32.gmra.mxu0 %v387
        %v526 = vpop.f32.mrf.mxu0
        %v527 = vadd.f32 %v462, %v526
        %528 = vmatmul.f32.gmra.mxu0 %v388
        %v529 = vpop.f32.mrf.mxu0
        %v530 = vadd.f32 %v462, %v529
        %531 = vmatmul.f32.gmra.mxu0 %v389
        %v532 = vpop.f32.mrf.mxu0
        %v533 = vadd.f32 %v462, %v532
        %534 = vmatmul.f32.gmra.mxu0 %v390
        %v535 = vpop.f32.mrf.mxu0
        %v536 = vadd.f32 %v462, %v535
        %537 = vmatmul.f32.gmra.mxu0 %v391
        %v538 = vpop.f32.mrf.mxu0
        %v539 = vadd.f32 %v462, %v538
        %540 = vmatmul.f32.gmra.mxu0 %v392
        %v541 = vpop.f32.mrf.mxu0
        %v542 = vadd.f32 %v462, %v541
        %543 = vmatmul.f32.gmra.mxu0 %v393
        %v544 = vpop.f32.mrf.mxu0
        %v545 = vadd.f32 %v462, %v544
        %546 = vmatmul.f32.gmra.mxu0 %v394
        %v547 = vpop.f32.mrf.mxu0
        %v548 = vadd.f32 %v462, %v547
        %549 = vmatmul.f32.gmra.mxu0 %v395
        %v550 = vpop.f32.mrf.mxu0
        %v551 = vadd.f32 %v462, %v550
        %552 = vmatmul.f32.gmra.mxu0 %v396
        %v553 = vpop.f32.mrf.mxu0
        %v554 = vadd.f32 %v462, %v553
        %555 = vmatmul.f32.gmra.mxu0 %v397
        %v556 = vpop.f32.mrf.mxu0
        %v557 = vadd.f32 %v462, %v556
        %558 = vmatmul.f32.gmra.mxu0 %v398
        %v559 = vpop.f32.mrf.mxu0
        %v560 = vadd.f32 %v462, %v559
        %561 = vmatmul.f32.gmra.mxu0 %v399
        %v562 = vpop.f32.mrf.mxu0
        %v563 = vadd.f32 %v462, %v562
        %564 = vmatmul.f32.gmra.mxu0 %v400
        %v565 = vpop.f32.mrf.mxu0
        %v566 = vadd.f32 %v462, %v565
        %567 = vmatmul.f32.gmra.mxu0 %v401
        %v568 = vpop.f32.mrf.mxu0
        %v569 = vadd.f32 %v462, %v568
        %570 = vmatmul.f32.gmra.mxu0 %v402
        %v571 = vpop.f32.mrf.mxu0
        %v572 = vadd.f32 %v462, %v571
        %573 = vmatmul.f32.gmra.mxu0 %v403
        %v574 = vpop.f32.mrf.mxu0
        %v575 = vadd.f32 %v462, %v574
        %576 = vmatmul.f32.gmra.mxu0 %v404
        %v577 = vpop.f32.mrf.mxu0
        %v578 = vadd.f32 %v462, %v577
        %579 = vmatmul.f32.gmra.mxu0 %v405
        %v580 = vpop.f32.mrf.mxu0
        %v581 = vadd.f32 %v462, %v580
        %582 = vmatmul.f32.gmra.mxu0 %v406
        %v583 = vpop.f32.mrf.mxu0
        %v584 = vadd.f32 %v462, %v583
        %585 = vmatmul.f32.gmra.mxu0 %v407
        %v586 = vpop.f32.mrf.mxu0
        %v587 = vadd.f32 %v462, %v586
        %588 = vmatmul.f32.gmra.mxu0 %v408
        %v589 = vpop.f32.mrf.mxu0
        %v590 = vadd.f32 %v462, %v589
        %591 = vmatmul.f32.gmra.mxu0 %v409
        %v592 = vpop.f32.mrf.mxu0
        %v593 = vadd.f32 %v462, %v592
        %594 = vmatmul.f32.gmra.mxu0 %v410
        %v595 = vpop.f32.mrf.mxu0
        %v596 = vadd.f32 %v462, %v595
        %597 = vmatmul.f32.gmra.mxu0 %v411
        %v598 = vpop.f32.mrf.mxu0
        %v599 = vadd.f32 %v462, %v598
        %600 = vmatmul.f32.gmra.mxu0 %v412
        %v601 = vpop.f32.mrf.mxu0
        %v602 = vadd.f32 %v462, %v601
        %603 = vmatmul.f32.gmra.mxu0 %v413
        %v604 = vpop.f32.mrf.mxu0
        %v605 = vadd.f32 %v462, %v604
        %606 = vmatmul.f32.gmra.mxu0 %v414
        %v607 = vpop.f32.mrf.mxu0
        %v608 = vadd.f32 %v462, %v607
        %609 = vmatmul.f32.gmra.mxu0 %v415
        %v610 = vpop.f32.mrf.mxu0
        %v611 = vadd.f32 %v462, %v610
        %612 = vmatmul.f32.gmra.mxu0 %v416
        %v613 = vpop.f32.mrf.mxu0
        %v614 = vadd.f32 %v462, %v613
        %615 = vmatmul.f32.gmra.mxu0 %v417
        %v616 = vpop.f32.mrf.mxu0
        %v617 = vadd.f32 %v462, %v616
        %618 = vmatmul.f32.gmra.mxu0 %v418
        %v619 = vpop.f32.mrf.mxu0
        %v620 = vadd.f32 %v462, %v619
        %621 = vmatmul.f32.gmra.mxu0 %v419
        %v622 = vpop.f32.mrf.mxu0
        %v623 = vadd.f32 %v462, %v622
        %624 = vmatmul.f32.gmra.mxu0 %v420
        %v625 = vpop.f32.mrf.mxu0
        %v626 = vadd.f32 %v462, %v625
        %627 = vmatmul.f32.gmra.mxu0 %v421
        %v628 = vpop.f32.mrf.mxu0
        %v629 = vadd.f32 %v462, %v628
        %630 = vmatmul.f32.gmra.mxu0 %v422
        %v631 = vpop.f32.mrf.mxu0
        %v632 = vadd.f32 %v462, %v631
        %633 = vmatmul.f32.gmra.mxu0 %v423
        %v634 = vpop.f32.mrf.mxu0
        %v635 = vadd.f32 %v462, %v634
        %636 = vmatmul.f32.gmra.mxu0 %v424
        %v637 = vpop.f32.mrf.mxu0
        %v638 = vadd.f32 %v462, %v637
        %639 = vmatmul.f32.gmra.mxu0 %v425
        %v640 = vpop.f32.mrf.mxu0
        %v641 = vadd.f32 %v462, %v640
        %642 = vmatmul.f32.gmra.mxu0 %v426
        %v643 = vpop.f32.mrf.mxu0
        %v644 = vadd.f32 %v462, %v643
        %645 = vmatmul.f32.gmra.mxu0 %v427
        %v646 = vpop.f32.mrf.mxu0
        %v647 = vadd.f32 %v462, %v646
        %648 = vmatmul.f32.gmra.mxu0 %v428
        %v649 = vpop.f32.mrf.mxu0
        %v650 = vadd.f32 %v462, %v649
        %651 = vmatmul.f32.gmra.mxu0 %v429
        %v652 = vpop.f32.mrf.mxu0
        %v653 = vadd.f32 %v462, %v652
        %654 = vmatmul.f32.gmra.mxu0 %v430
        %v655 = vpop.f32.mrf.mxu0
        %v656 = vadd.f32 %v462, %v655
        %657 = vmatmul.f32.gmra.mxu0 %v431
        %v658 = vpop.f32.mrf.mxu0
        %v659 = vadd.f32 %v462, %v658
        %660 = vmatmul.f32.gmra.mxu0 %v432
        %v661 = vpop.f32.mrf.mxu0
        %v662 = vadd.f32 %v462, %v661
        %663 = vmatmul.f32.gmra.mxu0 %v433
        %v664 = vpop.f32.mrf.mxu0
        %v665 = vadd.f32 %v462, %v664
        %666 = vmatmul.f32.gmra.mxu0 %v434
        %v667 = vpop.f32.mrf.mxu0
        %v668 = vadd.f32 %v462, %v667
        %669 = vmatmul.f32.gmra.mxu0 %v435
        %v670 = vpop.f32.mrf.mxu0
        %v671 = vadd.f32 %v462, %v670
        %672 = vmatmul.f32.gmra.mxu0 %v436
        %v673 = vpop.f32.mrf.mxu0
        %v674 = vadd.f32 %v462, %v673
        %675 = vmatmul.f32.gmra.mxu0 %v437
        %v676 = vpop.f32.mrf.mxu0
        %v677 = vadd.f32 %v462, %v676
        %678 = vmatmul.f32.gmra.mxu0 %v438
        %v679 = vpop.f32.mrf.mxu0
        %v680 = vadd.f32 %v462, %v679
        %681 = vmatmul.f32.gmra.mxu0 %v439
        %v682 = vpop.f32.mrf.mxu0
        %v683 = vadd.f32 %v462, %v682
        %684 = vmatmul.f32.gmra.mxu0 %v440
        %v685 = vpop.f32.mrf.mxu0
        %v686 = vadd.f32 %v462, %v685
        %687 = vmatmul.f32.gmra.mxu0 %v441
        %v688 = vpop.f32.mrf.mxu0
        %v689 = vadd.f32 %v462, %v688
        %690 = vmatmul.f32.gmra.mxu0 %v442
        %v691 = vpop.f32.mrf.mxu0
        %v692 = vadd.f32 %v462, %v691
        %693 = vmatmul.f32.gmra.mxu0 %v443
        %v694 = vpop.f32.mrf.mxu0
        %v695 = vadd.f32 %v462, %v694
        %696 = vdwg.mxu0
        %v697 = vmax.f32 %v482, 0.0
        %v698 = vmax.f32 %v485, 0.0
        %v699 = vmax.f32 %v488, 0.0
        %v700 = vmax.f32 %v491, 0.0
        %v701 = vmax.f32 %v494, 0.0
        %v702 = vmax.f32 %v497, 0.0
        %v703 = vmax.f32 %v500, 0.0
        %v704 = vmax.f32 %v503, 0.0
        %v705 = vmax.f32 %v506, 0.0
        %v706 = vmax.f32 %v509, 0.0
        %v707 = vmax.f32 %v512, 0.0
        %v708 = vmax.f32 %v515, 0.0
        %v709 = vmax.f32 %v518, 0.0
        %v710 = vmax.f32 %v521, 0.0
        %v711 = vmax.f32 %v524, 0.0
        %v712 = vmax.f32 %v527, 0.0
        %v713 = vmax.f32 %v530, 0.0
        %v714 = vmax.f32 %v533, 0.0
        %v715 = vmax.f32 %v536, 0.0
        %v716 = vmax.f32 %v539, 0.0
        %v717 = vmax.f32 %v542, 0.0
        %v718 = vmax.f32 %v545, 0.0
        %v719 = vmax.f32 %v548, 0.0
        %v720 = vmax.f32 %v551, 0.0
        %v721 = vmax.f32 %v554, 0.0
        %v722 = vmax.f32 %v557, 0.0
        %v723 = vmax.f32 %v560, 0.0
        %v724 = vmax.f32 %v563, 0.0
        %v725 = vmax.f32 %v566, 0.0
        %v726 = vmax.f32 %v569, 0.0
        %v727 = vmax.f32 %v572, 0.0
        %v728 = vmax.f32 %v575, 0.0
        %v729 = vmax.f32 %v578, 0.0
        %v730 = vmax.f32 %v581, 0.0
        %v731 = vmax.f32 %v584, 0.0
        %v732 = vmax.f32 %v587, 0.0
        %v733 = vmax.f32 %v590, 0.0
        %v734 = vmax.f32 %v593, 0.0
        %v735 = vmax.f32 %v596, 0.0
        %v736 = vmax.f32 %v599, 0.0
        %v737 = vmax.f32 %v602, 0.0
        %v738 = vmax.f32 %v605, 0.0
        %v739 = vmax.f32 %v608, 0.0
        %v740 = vmax.f32 %v611, 0.0
        %v741 = vmax.f32 %v614, 0.0
        %v742 = vmax.f32 %v617, 0.0
        %v743 = vmax.f32 %v620, 0.0
        %v744 = vmax.f32 %v623, 0.0
        %v745 = vmax.f32 %v626, 0.0
        %v746 = vmax.f32 %v629, 0.0
        %v747 = vmax.f32 %v632, 0.0
        %v748 = vmax.f32 %v635, 0.0
        %v749 = vmax.f32 %v638, 0.0
        %v750 = vmax.f32 %v641, 0.0
        %v751 = vmax.f32 %v644, 0.0
        %v752 = vmax.f32 %v647, 0.0
        %v753 = vmax.f32 %v650, 0.0
        %v754 = vmax.f32 %v653, 0.0
        %v755 = vmax.f32 %v656, 0.0
        %v756 = vmax.f32 %v659, 0.0
        %v757 = vmax.f32 %v662, 0.0
        %v758 = vmax.f32 %v665, 0.0
        %v759 = vmax.f32 %v668, 0.0
        %v760 = vmax.f32 %v671, 0.0
        %v761 = vmax.f32 %v674, 0.0
        %v762 = vmax.f32 %v677, 0.0
        %v763 = vmax.f32 %v680, 0.0
        %v764 = vmax.f32 %v683, 0.0
        %v765 = vmax.f32 %v686, 0.0
        %v766 = vmax.f32 %v689, 0.0
        %v767 = vmax.f32 %v692, 0.0
        %v768 = vmax.f32 %v695, 0.0
        %v769 = vld [vmem:[%s1] sm:$0xff]
        %v770 = vld [vmem:[%s1 + $0x8] sm:$0xff]
        %v771 = vld [vmem:[%s1 + $0x10] sm:$0xff]
        %v772 = vld [vmem:[%s1 + $0x18] sm:$0xff]
        %v773 = vld [vmem:[%s1 + $0x20] sm:$0xff]
        %v774 = vld [vmem:[%s1 + $0x28] sm:$0xff]
        %v775 = vld [vmem:[%s1 + $0x30] sm:$0xff]
        %v776 = vld [vmem:[%s1 + $0x38] sm:$0xff]
        %v777 = vld [vmem:[%s1 + $0x40] sm:$0xff]
        %v778 = vld [vmem:[%s1 + $0x48] sm:$0xff]
        %v779 = vld [vmem:[%s1 + $0x50] sm:$0xff]
        %v780 = vld [vmem:[%s1 + $0x58] sm:$0xff]
        %v781 = vld [vmem:[%s1 + $0x60] sm:$0xff]
        %v782 = vld [vmem:[%s1 + $0x68] sm:$0xff]
        %v783 = vld [vmem:[%s1 + $0x70] sm:$0xff]
        %v784 = vld [vmem:[%s1 + $0x78] sm:$0xff]
        %v785 = vld [vmem:[%s1 + $0x80] sm:$0xff]
        %v786 = vld [vmem:[%s1 + $0x88] sm:$0xff]
        %v787 = vld [vmem:[%s1 + $0x90] sm:$0xff]
        %v788 = vld [vmem:[%s1 + $0x98] sm:$0xff]
        %v789 = vld [vmem:[%s1 + $0xa0] sm:$0xff]
        %v790 = vld [vmem:[%s1 + $0xa8] sm:$0xff]
        %v791 = vld [vmem:[%s1 + $0xb0] sm:$0xff]
        %v792 = vld [vmem:[%s1 + $0xb8] sm:$0xff]
        %v793 = vld [vmem:[%s1 + $0xc0] sm:$0xff]
        %v794 = vld [vmem:[%s1 + $0xc8] sm:$0xff]
        %v795 = vld [vmem:[%s1 + $0xd0] sm:$0xff]
        %v796 = vld [vmem:[%s1 + $0xd8] sm:$0xff]
        %v797 = vld [vmem:[%s1 + $0xe0] sm:$0xff]
        %v798 = vld [vmem:[%s1 + $0xe8] sm:$0xff]
        %v799 = vld [vmem:[%s1 + $0xf0] sm:$0xff]
        %v800 = vld [vmem:[%s1 + $0xf8] sm:$0xff]
        %v801 = vld [vmem:[%s1 + $0x100] sm:$0xff]
        %v802 = vld [vmem:[%s1 + $0x108] sm:$0xff]
        %v803 = vld [vmem:[%s1 + $0x110] sm:$0xff]
        %v804 = vld [vmem:[%s1 + $0x118] sm:$0xff]
        %v805 = vld [vmem:[%s1 + $0x120] sm:$0xff]
        %v806 = vld [vmem:[%s1 + $0x128] sm:$0xff]
        %v807 = vld [vmem:[%s1 + $0x130] sm:$0xff]
        %v808 = vld [vmem:[%s1 + $0x138] sm:$0xff]
        %v809 = vld [vmem:[%s1 + $0x140] sm:$0xff]
        %v810 = vld [vmem:[%s1 + $0x148] sm:$0xff]
        %v811 = vld [vmem:[%s1 + $0x150] sm:$0xff]
        %v812 = vld [vmem:[%s1 + $0x158] sm:$0xff]
        %v813 = vld [vmem:[%s1 + $0x160] sm:$0xff]
        %v814 = vld [vmem:[%s1 + $0x168] sm:$0xff]
        %v815 = vld [vmem:[%s1 + $0x170] sm:$0xff]
        %v816 = vld [vmem:[%s1 + $0x178] sm:$0xff]
        %v817 = vld [vmem:[%s1 + $0x180] sm:$0xff]
        %v818 = vld [vmem:[%s1 + $0x188] sm:$0xff]
        %v819 = vld [vmem:[%s1 + $0x190] sm:$0xff]
        %v820 = vld [vmem:[%s1 + $0x198] sm:$0xff]
        %v821 = vld [vmem:[%s1 + $0x1a0] sm:$0xff]
        %v822 = vld [vmem:[%s1 + $0x1a8] sm:$0xff]
        %v823 = vld [vmem:[%s1 + $0x1b0] sm:$0xff]
        %v824 = vld [vmem:[%s1 + $0x1b8] sm:$0xff]
        %v825 = vld [vmem:[%s1 + $0x1c0] sm:$0xff]
        %v826 = vld [vmem:[%s1 + $0x1c8] sm:$0xff]
        %v827 = vld [vmem:[%s1 + $0x1d0] sm:$0xff]
        %v828 = vld [vmem:[%s1 + $0x1d8] sm:$0xff]
        %v829 = vld [vmem:[%s1 + $0x1e0] sm:$0xff]
        %v830 = vld [vmem:[%s1 + $0x1e8] sm:$0xff]
        %v831 = vld [vmem:[%s1 + $0x1f0] sm:$0xff]
        %v832 = vld [vmem:[%s1 + $0x1f8] sm:$0xff]
        %v833 = vld [vmem:[%s1 + $0x200] sm:$0xff]
        %v834 = vld [vmem:[%s1 + $0x208] sm:$0xff]
        %v835 = vld [vmem:[%s1 + $0x210] sm:$0xff]
        %v836 = vld [vmem:[%s1 + $0x218] sm:$0xff]
        %v837 = vld [vmem:[%s1 + $0x220] sm:$0xff]
        %v838 = vld [vmem:[%s1 + $0x228] sm:$0xff]
        %v839 = vld [vmem:[%s1 + $0x230] sm:$0xff]
        %v840 = vld [vmem:[%s1 + $0x238] sm:$0xff]
        %842 = vset.pattern.permute.xlu0 0
        %843 = vperm.xlu0 %842, %v769
        %v844 = vpop.permute.xlu0 %843
        %847 = vset.pattern.permute.xlu0 0
        %848 = vperm.xlu0 %847, %v770
        %v849 = vpop.permute.xlu0 %848
        %852 = vset.pattern.permute.xlu0 0
        %853 = vperm.xlu0 %852, %v771
        %v854 = vpop.permute.xlu0 %853
        %857 = vset.pattern.permute.xlu0 0
        %858 = vperm.xlu0 %857, %v772
        %v859 = vpop.permute.xlu0 %858
        %862 = vset.pattern.permute.xlu0 0
        %863 = vperm.xlu0 %862, %v773
        %v864 = vpop.permute.xlu0 %863
        %867 = vset.pattern.permute.xlu0 0
        %868 = vperm.xlu0 %867, %v774
        %v869 = vpop.permute.xlu0 %868
        %872 = vset.pattern.permute.xlu0 0
        %873 = vperm.xlu0 %872, %v775
        %v874 = vpop.permute.xlu0 %873
        %877 = vset.pattern.permute.xlu0 0
        %878 = vperm.xlu0 %877, %v776
        %v879 = vpop.permute.xlu0 %878
        %882 = vset.pattern.permute.xlu0 0
        %883 = vperm.xlu0 %882, %v777
        %v884 = vpop.permute.xlu0 %883
        %887 = vset.pattern.permute.xlu0 0
        %888 = vperm.xlu0 %887, %v778
        %v889 = vpop.permute.xlu0 %888
        %892 = vset.pattern.permute.xlu0 0
        %893 = vperm.xlu0 %892, %v779
        %v894 = vpop.permute.xlu0 %893
        %897 = vset.pattern.permute.xlu0 0
        %898 = vperm.xlu0 %897, %v780
        %v899 = vpop.permute.xlu0 %898
        %902 = vset.pattern.permute.xlu0 0
        %903 = vperm.xlu0 %902, %v781
        %v904 = vpop.permute.xlu0 %903
        %907 = vset.pattern.permute.xlu0 0
        %908 = vperm.xlu0 %907, %v782
        %v909 = vpop.permute.xlu0 %908
        %912 = vset.pattern.permute.xlu0 0
        %913 = vperm.xlu0 %912, %v783
        %v914 = vpop.permute.xlu0 %913
        %917 = vset.pattern.permute.xlu0 0
        %918 = vperm.xlu0 %917, %v784
        %v919 = vpop.permute.xlu0 %918
        %922 = vset.pattern.permute.xlu0 0
        %923 = vperm.xlu0 %922, %v785
        %v924 = vpop.permute.xlu0 %923
        %927 = vset.pattern.permute.xlu0 0
        %928 = vperm.xlu0 %927, %v786
        %v929 = vpop.permute.xlu0 %928
        %932 = vset.pattern.permute.xlu0 0
        %933 = vperm.xlu0 %932, %v787
        %v934 = vpop.permute.xlu0 %933
        %937 = vset.pattern.permute.xlu0 0
        %938 = vperm.xlu0 %937, %v788
        %v939 = vpop.permute.xlu0 %938
        %942 = vset.pattern.permute.xlu0 0
        %943 = vperm.xlu0 %942, %v789
        %v944 = vpop.permute.xlu0 %943
        %947 = vset.pattern.permute.xlu0 0
        %948 = vperm.xlu0 %947, %v790
        %v949 = vpop.permute.xlu0 %948
        %952 = vset.pattern.permute.xlu0 0
        %953 = vperm.xlu0 %952, %v791
        %v954 = vpop.permute.xlu0 %953
        %957 = vset.pattern.permute.xlu0 0
        %958 = vperm.xlu0 %957, %v792
        %v959 = vpop.permute.xlu0 %958
        %962 = vset.pattern.permute.xlu0 0
        %963 = vperm.xlu0 %962, %v793
        %v964 = vpop.permute.xlu0 %963
        %967 = vset.pattern.permute.xlu0 0
        %968 = vperm.xlu0 %967, %v794
        %v969 = vpop.permute.xlu0 %968
        %972 = vset.pattern.permute.xlu0 0
        %973 = vperm.xlu0 %972, %v795
        %v974 = vpop.permute.xlu0 %973
        %977 = vset.pattern.permute.xlu0 0
        %978 = vperm.xlu0 %977, %v796
        %v979 = vpop.permute.xlu0 %978
        %982 = vset.pattern.permute.xlu0 0
        %983 = vperm.xlu0 %982, %v797
        %v984 = vpop.permute.xlu0 %983
        %987 = vset.pattern.permute.xlu0 0
        %988 = vperm.xlu0 %987, %v798
        %v989 = vpop.permute.xlu0 %988
        %992 = vset.pattern.permute.xlu0 0
        %993 = vperm.xlu0 %992, %v799
        %v994 = vpop.permute.xlu0 %993
        %997 = vset.pattern.permute.xlu0 0
        %998 = vperm.xlu0 %997, %v800
        %v999 = vpop.permute.xlu0 %998
        %1002 = vset.pattern.permute.xlu0 0
        %1003 = vperm.xlu0 %1002, %v801
        %v1004 = vpop.permute.xlu0 %1003
        %1007 = vset.pattern.permute.xlu0 0
        %1008 = vperm.xlu0 %1007, %v802
        %v1009 = vpop.permute.xlu0 %1008
        %1012 = vset.pattern.permute.xlu0 0
        %1013 = vperm.xlu0 %1012, %v803
        %v1014 = vpop.permute.xlu0 %1013
        %1017 = vset.pattern.permute.xlu0 0
        %1018 = vperm.xlu0 %1017, %v804
        %v1019 = vpop.permute.xlu0 %1018
        %1022 = vset.pattern.permute.xlu0 0
        %1023 = vperm.xlu0 %1022, %v805
        %v1024 = vpop.permute.xlu0 %1023
        %1027 = vset.pattern.permute.xlu0 0
        %1028 = vperm.xlu0 %1027, %v806
        %v1029 = vpop.permute.xlu0 %1028
        %1032 = vset.pattern.permute.xlu0 0
        %1033 = vperm.xlu0 %1032, %v807
        %v1034 = vpop.permute.xlu0 %1033
        %1037 = vset.pattern.permute.xlu0 0
        %1038 = vperm.xlu0 %1037, %v808
        %v1039 = vpop.permute.xlu0 %1038
        %1042 = vset.pattern.permute.xlu0 0
        %1043 = vperm.xlu0 %1042, %v809
        %v1044 = vpop.permute.xlu0 %1043
        %1047 = vset.pattern.permute.xlu0 0
        %1048 = vperm.xlu0 %1047, %v810
        %v1049 = vpop.permute.xlu0 %1048
        %1052 = vset.pattern.permute.xlu0 0
        %1053 = vperm.xlu0 %1052, %v811
        %v1054 = vpop.permute.xlu0 %1053
        %1057 = vset.pattern.permute.xlu0 0
        %1058 = vperm.xlu0 %1057, %v812
        %v1059 = vpop.permute.xlu0 %1058
        %1062 = vset.pattern.permute.xlu0 0
        %1063 = vperm.xlu0 %1062, %v813
        %v1064 = vpop.permute.xlu0 %1063
        %1067 = vset.pattern.permute.xlu0 0
        %1068 = vperm.xlu0 %1067, %v814
        %v1069 = vpop.permute.xlu0 %1068
        %1072 = vset.pattern.permute.xlu0 0
        %1073 = vperm.xlu0 %1072, %v815
        %v1074 = vpop.permute.xlu0 %1073
        %1077 = vset.pattern.permute.xlu0 0
        %1078 = vperm.xlu0 %1077, %v816
        %v1079 = vpop.permute.xlu0 %1078
        %1082 = vset.pattern.permute.xlu0 0
        %1083 = vperm.xlu0 %1082, %v817
        %v1084 = vpop.permute.xlu0 %1083
        %1087 = vset.pattern.permute.xlu0 0
        %1088 = vperm.xlu0 %1087, %v818
        %v1089 = vpop.permute.xlu0 %1088
        %1092 = vset.pattern.permute.xlu0 0
        %1093 = vperm.xlu0 %1092, %v819
        %v1094 = vpop.permute.xlu0 %1093
        %1097 = vset.pattern.permute.xlu0 0
        %1098 = vperm.xlu0 %1097, %v820
        %v1099 = vpop.permute.xlu0 %1098
        %1102 = vset.pattern.permute.xlu0 0
        %1103 = vperm.xlu0 %1102, %v821
        %v1104 = vpop.permute.xlu0 %1103
        %1107 = vset.pattern.permute.xlu0 0
        %1108 = vperm.xlu0 %1107, %v822
        %v1109 = vpop.permute.xlu0 %1108
        %1112 = vset.pattern.permute.xlu0 0
        %1113 = vperm.xlu0 %1112, %v823
        %v1114 = vpop.permute.xlu0 %1113
        %1117 = vset.pattern.permute.xlu0 0
        %1118 = vperm.xlu0 %1117, %v824
        %v1119 = vpop.permute.xlu0 %1118
        %1122 = vset.pattern.permute.xlu0 0
        %1123 = vperm.xlu0 %1122, %v825
        %v1124 = vpop.permute.xlu0 %1123
        %1127 = vset.pattern.permute.xlu0 0
        %1128 = vperm.xlu0 %1127, %v826
        %v1129 = vpop.permute.xlu0 %1128
        %1132 = vset.pattern.permute.xlu0 0
        %1133 = vperm.xlu0 %1132, %v827
        %v1134 = vpop.permute.xlu0 %1133
        %1137 = vset.pattern.permute.xlu0 0
        %1138 = vperm.xlu0 %1137, %v828
        %v1139 = vpop.permute.xlu0 %1138
        %1142 = vset.pattern.permute.xlu0 0
        %1143 = vperm.xlu0 %1142, %v829
        %v1144 = vpop.permute.xlu0 %1143
        %1147 = vset.pattern.permute.xlu0 0
        %1148 = vperm.xlu0 %1147, %v830
        %v1149 = vpop.permute.xlu0 %1148
        %1152 = vset.pattern.permute.xlu0 0
        %1153 = vperm.xlu0 %1152, %v831
        %v1154 = vpop.permute.xlu0 %1153
        %1157 = vset.pattern.permute.xlu0 0
        %1158 = vperm.xlu0 %1157, %v832
        %v1159 = vpop.permute.xlu0 %1158
        %1162 = vset.pattern.permute.xlu0 0
        %1163 = vperm.xlu0 %1162, %v833
        %v1164 = vpop.permute.xlu0 %1163
        %1167 = vset.pattern.permute.xlu0 0
        %1168 = vperm.xlu0 %1167, %v834
        %v1169 = vpop.permute.xlu0 %1168
        %1172 = vset.pattern.permute.xlu0 0
        %1173 = vperm.xlu0 %1172, %v835
        %v1174 = vpop.permute.xlu0 %1173
        %1177 = vset.pattern.permute.xlu0 0
        %1178 = vperm.xlu0 %1177, %v836
        %v1179 = vpop.permute.xlu0 %1178
        %1182 = vset.pattern.permute.xlu0 0
        %1183 = vperm.xlu0 %1182, %v837
        %v1184 = vpop.permute.xlu0 %1183
        %1187 = vset.pattern.permute.xlu0 0
        %1188 = vperm.xlu0 %1187, %v838
        %v1189 = vpop.permute.xlu0 %1188
        %1192 = vset.pattern.permute.xlu0 0
        %1193 = vperm.xlu0 %1192, %v839
        %v1194 = vpop.permute.xlu0 %1193
        %1197 = vset.pattern.permute.xlu0 0
        %1198 = vperm.xlu0 %1197, %v840
        %v1199 = vpop.permute.xlu0 %1198
        %v1201 = vmul.f32 %v697, %v844
        %v1202 = vmul.f32 %v698, %v849
        %v1203 = vmul.f32 %v699, %v854
        %v1204 = vmul.f32 %v700, %v859
        %v1205 = vmul.f32 %v701, %v864
        %v1206 = vmul.f32 %v702, %v869
        %v1207 = vmul.f32 %v703, %v874
        %v1208 = vmul.f32 %v704, %v879
        %v1209 = vmul.f32 %v705, %v884
        %v1210 = vmul.f32 %v706, %v889
        %v1211 = vmul.f32 %v707, %v894
        %v1212 = vmul.f32 %v708, %v899
        %v1213 = vmul.f32 %v709, %v904
        %v1214 = vmul.f32 %v710, %v909
        %v1215 = vmul.f32 %v711, %v914
        %v1216 = vmul.f32 %v712, %v919
        %v1217 = vmul.f32 %v713, %v924
        %v1218 = vmul.f32 %v714, %v929
        %v1219 = vmul.f32 %v715, %v934
        %v1220 = vmul.f32 %v716, %v939
        %v1221 = vmul.f32 %v717, %v944
        %v1222 = vmul.f32 %v718, %v949
        %v1223 = vmul.f32 %v719, %v954
        %v1224 = vmul.f32 %v720, %v959
        %v1225 = vmul.f32 %v721, %v964
        %v1226 = vmul.f32 %v722, %v969
        %v1227 = vmul.f32 %v723, %v974
        %v1228 = vmul.f32 %v724, %v979
        %v1229 = vmul.f32 %v725, %v984
        %v1230 = vmul.f32 %v726, %v989
        %v1231 = vmul.f32 %v727, %v994
        %v1232 = vmul.f32 %v728, %v999
        %v1233 = vmul.f32 %v729, %v1004
        %v1234 = vmul.f32 %v730, %v1009
        %v1235 = vmul.f32 %v731, %v1014
        %v1236 = vmul.f32 %v732, %v1019
        %v1237 = vmul.f32 %v733, %v1024
        %v1238 = vmul.f32 %v734, %v1029
        %v1239 = vmul.f32 %v735, %v1034
        %v1240 = vmul.f32 %v736, %v1039
        %v1241 = vmul.f32 %v737, %v1044
        %v1242 = vmul.f32 %v738, %v1049
        %v1243 = vmul.f32 %v739, %v1054
        %v1244 = vmul.f32 %v740, %v1059
        %v1245 = vmul.f32 %v741, %v1064
        %v1246 = vmul.f32 %v742, %v1069
        %v1247 = vmul.f32 %v743, %v1074
        %v1248 = vmul.f32 %v744, %v1079
        %v1249 = vmul.f32 %v745, %v1084
        %v1250 = vmul.f32 %v746, %v1089
        %v1251 = vmul.f32 %v747, %v1094
        %v1252 = vmul.f32 %v748, %v1099
        %v1253 = vmul.f32 %v749, %v1104
        %v1254 = vmul.f32 %v750, %v1109
        %v1255 = vmul.f32 %v751, %v1114
        %v1256 = vmul.f32 %v752, %v1119
        %v1257 = vmul.f32 %v753, %v1124
        %v1258 = vmul.f32 %v754, %v1129
        %v1259 = vmul.f32 %v755, %v1134
        %v1260 = vmul.f32 %v756, %v1139
        %v1261 = vmul.f32 %v757, %v1144
        %v1262 = vmul.f32 %v758, %v1149
        %v1263 = vmul.f32 %v759, %v1154
        %v1264 = vmul.f32 %v760, %v1159
        %v1265 = vmul.f32 %v761, %v1164
        %v1266 = vmul.f32 %v762, %v1169
        %v1267 = vmul.f32 %v763, %v1174
        %v1268 = vmul.f32 %v764, %v1179
        %v1269 = vmul.f32 %v765, %v1184
        %v1270 = vmul.f32 %v766, %v1189
        %v1271 = vmul.f32 %v767, %v1194
        %v1272 = vmul.f32 %v768, %v1199
        %1273 = vst [vmem:[#allocation2] sm:$0xff] %v1201
        %1274 = vst [vmem:[#allocation2 + $0x8] sm:$0xff] %v1202
        %1275 = vst [vmem:[#allocation2 + $0x10] sm:$0xff] %v1203
        %1276 = vst [vmem:[#allocation2 + $0x18] sm:$0xff] %v1204
        %1277 = vst [vmem:[#allocation2 + $0x20] sm:$0xff] %v1205
        %1278 = vst [vmem:[#allocation2 + $0x28] sm:$0xff] %v1206
        %1279 = vst [vmem:[#allocation2 + $0x30] sm:$0xff] %v1207
        %1280 = vst [vmem:[#allocation2 + $0x38] sm:$0xff] %v1208
        %1281 = vst [vmem:[#allocation2 + $0x40] sm:$0xff] %v1209
        %1282 = vst [vmem:[#allocation2 + $0x48] sm:$0xff] %v1210
        %1283 = vst [vmem:[#allocation2 + $0x50] sm:$0xff] %v1211
        %1284 = vst [vmem:[#allocation2 + $0x58] sm:$0xff] %v1212
        %1285 = vst [vmem:[#allocation2 + $0x60] sm:$0xff] %v1213
        %1286 = vst [vmem:[#allocation2 + $0x68] sm:$0xff] %v1214
        %1287 = vst [vmem:[#allocation2 + $0x70] sm:$0xff] %v1215
        %1288 = vst [vmem:[#allocation2 + $0x78] sm:$0xff] %v1216
        %1289 = vst [vmem:[#allocation2 + $0x80] sm:$0xff] %v1217
        %1290 = vst [vmem:[#allocation2 + $0x88] sm:$0xff] %v1218
        %1291 = vst [vmem:[#allocation2 + $0x90] sm:$0xff] %v1219
        %1292 = vst [vmem:[#allocation2 + $0x98] sm:$0xff] %v1220
        %1293 = vst [vmem:[#allocation2 + $0xa0] sm:$0xff] %v1221
        %1294 = vst [vmem:[#allocation2 + $0xa8] sm:$0xff] %v1222
        %1295 = vst [vmem:[#allocation2 + $0xb0] sm:$0xff] %v1223
        %1296 = vst [vmem:[#allocation2 + $0xb8] sm:$0xff] %v1224
        %1297 = vst [vmem:[#allocation2 + $0xc0] sm:$0xff] %v1225
        %1298 = vst [vmem:[#allocation2 + $0xc8] sm:$0xff] %v1226
        %1299 = vst [vmem:[#allocation2 + $0xd0] sm:$0xff] %v1227
        %1300 = vst [vmem:[#allocation2 + $0xd8] sm:$0xff] %v1228
        %1301 = vst [vmem:[#allocation2 + $0xe0] sm:$0xff] %v1229
        %1302 = vst [vmem:[#allocation2 + $0xe8] sm:$0xff] %v1230
        %1303 = vst [vmem:[#allocation2 + $0xf0] sm:$0xff] %v1231
        %1304 = vst [vmem:[#allocation2 + $0xf8] sm:$0xff] %v1232
        %1305 = vst [vmem:[#allocation2 + $0x100] sm:$0xff] %v1233
        %1306 = vst [vmem:[#allocation2 + $0x108] sm:$0xff] %v1234
        %1307 = vst [vmem:[#allocation2 + $0x110] sm:$0xff] %v1235
        %1308 = vst [vmem:[#allocation2 + $0x118] sm:$0xff] %v1236
        %1309 = vst [vmem:[#allocation2 + $0x120] sm:$0xff] %v1237
        %1310 = vst [vmem:[#allocation2 + $0x128] sm:$0xff] %v1238
        %1311 = vst [vmem:[#allocation2 + $0x130] sm:$0xff] %v1239
        %1312 = vst [vmem:[#allocation2 + $0x138] sm:$0xff] %v1240
        %1313 = vst [vmem:[#allocation2 + $0x140] sm:$0xff] %v1241
        %1314 = vst [vmem:[#allocation2 + $0x148] sm:$0xff] %v1242
        %1315 = vst [vmem:[#allocation2 + $0x150] sm:$0xff] %v1243
        %1316 = vst [vmem:[#allocation2 + $0x158] sm:$0xff] %v1244
        %1317 = vst [vmem:[#allocation2 + $0x160] sm:$0xff] %v1245
        %1318 = vst [vmem:[#allocation2 + $0x168] sm:$0xff] %v1246
        %1319 = vst [vmem:[#allocation2 + $0x170] sm:$0xff] %v1247
        %1320 = vst [vmem:[#allocation2 + $0x178] sm:$0xff] %v1248
        %1321 = vst [vmem:[#allocation2 + $0x180] sm:$0xff] %v1249
        %1322 = vst [vmem:[#allocation2 + $0x188] sm:$0xff] %v1250
        %1323 = vst [vmem:[#allocation2 + $0x190] sm:$0xff] %v1251
        %1324 = vst [vmem:[#allocation2 + $0x198] sm:$0xff] %v1252
        %1325 = vst [vmem:[#allocation2 + $0x1a0] sm:$0xff] %v1253
        %1326 = vst [vmem:[#allocation2 + $0x1a8] sm:$0xff] %v1254
        %1327 = vst [vmem:[#allocation2 + $0x1b0] sm:$0xff] %v1255
        %1328 = vst [vmem:[#allocation2 + $0x1b8] sm:$0xff] %v1256
        %1329 = vst [vmem:[#allocation2 + $0x1c0] sm:$0xff] %v1257
        %1330 = vst [vmem:[#allocation2 + $0x1c8] sm:$0xff] %v1258
        %1331 = vst [vmem:[#allocation2 + $0x1d0] sm:$0xff] %v1259
        %1332 = vst [vmem:[#allocation2 + $0x1d8] sm:$0xff] %v1260
        %1333 = vst [vmem:[#allocation2 + $0x1e0] sm:$0xff] %v1261
        %1334 = vst [vmem:[#allocation2 + $0x1e8] sm:$0xff] %v1262
        %1335 = vst [vmem:[#allocation2 + $0x1f0] sm:$0xff] %v1263
        %1336 = vst [vmem:[#allocation2 + $0x1f8] sm:$0xff] %v1264
        %1337 = vst [vmem:[#allocation2 + $0x200] sm:$0xff] %v1265
        %1338 = vst [vmem:[#allocation2 + $0x208] sm:$0xff] %v1266
        %1339 = vst [vmem:[#allocation2 + $0x210] sm:$0xff] %v1267
        %1340 = vst [vmem:[#allocation2 + $0x218] sm:$0xff] %v1268
        %1341 = vst [vmem:[#allocation2 + $0x220] sm:$0xff] %v1269
        %1342 = vst [vmem:[#allocation2 + $0x228] sm:$0xff] %v1270
        %1343 = vst [vmem:[#allocation2 + $0x230] sm:$0xff] %v1271
        %1344 = vst [vmem:[#allocation2 + $0x238] sm:$0xff] %v1272
        %v1345 = vld [vmem:[#allocation2] sm:$0xff]
        %v1346 = vld [vmem:[#allocation2 + $0x10] sm:$0xff]
        %v1347 = vld [vmem:[#allocation2 + $0x20] sm:$0xff]
        %v1348 = vld [vmem:[#allocation2 + $0x30] sm:$0xff]
        %v1349 = vld [vmem:[#allocation2 + $0x40] sm:$0xff]
        %v1350 = vld [vmem:[#allocation2 + $0x50] sm:$0xff]
        %v1351 = vld [vmem:[#allocation2 + $0x60] sm:$0xff]
        %v1352 = vld [vmem:[#allocation2 + $0x70] sm:$0xff]
        %v1353 = vld [vmem:[#allocation6] sm:$0xff]
        %v1354 = vld [vmem:[#allocation6 + $0x8] sm:$0xff]
        %v1355 = vld [vmem:[#allocation6 + $0x10] sm:$0xff]
        %v1356 = vld [vmem:[#allocation6 + $0x18] sm:$0xff]
        %v1357 = vld [vmem:[#allocation6 + $0x20] sm:$0xff]
        %v1358 = vld [vmem:[#allocation6 + $0x28] sm:$0xff]
        %v1359 = vld [vmem:[#allocation6 + $0x30] sm:$0xff]
        %v1360 = vld [vmem:[#allocation6 + $0x38] sm:$0xff]
        %v1361 = vld [vmem:[#allocation6 + $0x40] sm:$0xff]
        %v1362 = vld [vmem:[#allocation6 + $0x48] sm:$0xff]
        %v1363 = vld [vmem:[#allocation6 + $0x50] sm:$0xff]
        %v1364 = vld [vmem:[#allocation6 + $0x58] sm:$0xff]
        %v1365 = vld [vmem:[#allocation6 + $0x60] sm:$0xff]
        %v1366 = vld [vmem:[#allocation6 + $0x68] sm:$0xff]
        %v1367 = vld [vmem:[#allocation6 + $0x70] sm:$0xff]
        %v1368 = vld [vmem:[#allocation6 + $0x78] sm:$0xff]
        %s1369 = scalar_lea.vmem [#allocation2], 144
        %v1370 = vld [vmem:[%s1369] sm:$0xff]
        %v1371 = vld [vmem:[%s1369 + $0x10] sm:$0xff]
        %v1372 = vld [vmem:[%s1369 + $0x20] sm:$0xff]
        %v1373 = vld [vmem:[%s1369 + $0x30] sm:$0xff]
        %v1374 = vld [vmem:[%s1369 + $0x40] sm:$0xff]
        %v1375 = vld [vmem:[%s1369 + $0x50] sm:$0xff]
        %v1376 = vld [vmem:[%s1369 + $0x60] sm:$0xff]
        %v1377 = vld [vmem:[%s1369 + $0x70] sm:$0xff]
        %s1378 = scalar_lea.vmem [#allocation6], 128
        %v1379 = vld [vmem:[%s1378] sm:$0xff]
        %v1380 = vld [vmem:[%s1378 + $0x8] sm:$0xff]
        %v1381 = vld [vmem:[%s1378 + $0x10] sm:$0xff]
        %v1382 = vld [vmem:[%s1378 + $0x18] sm:$0xff]
        %v1383 = vld [vmem:[%s1378 + $0x20] sm:$0xff]
        %v1384 = vld [vmem:[%s1378 + $0x28] sm:$0xff]
        %v1385 = vld [vmem:[%s1378 + $0x30] sm:$0xff]
        %v1386 = vld [vmem:[%s1378 + $0x38] sm:$0xff]
        %v1387 = vld [vmem:[%s1378 + $0x40] sm:$0xff]
        %v1388 = vld [vmem:[%s1378 + $0x48] sm:$0xff]
        %v1389 = vld [vmem:[%s1378 + $0x50] sm:$0xff]
        %v1390 = vld [vmem:[%s1378 + $0x58] sm:$0xff]
        %v1391 = vld [vmem:[%s1378 + $0x60] sm:$0xff]
        %v1392 = vld [vmem:[%s1378 + $0x68] sm:$0xff]
        %v1393 = vld [vmem:[%s1378 + $0x70] sm:$0xff]
        %v1394 = vld [vmem:[%s1378 + $0x78] sm:$0xff]
        %1395 = vmatpush.msra.mxu0 %v1394
        %1396 = vmatpush.msra.mxu0 %v1393
        %1397 = vmatpush.msra.mxu0 %v1392
        %1398 = vmatpush.msra.mxu0 %v1391
        %1399 = vmatpush.msra.mxu0 %v1390
        %1400 = vmatpush.msra.mxu0 %v1389
        %1401 = vmatpush.msra.mxu0 %v1388
        %1402 = vmatpush.msra.mxu0 %v1387
        %1403 = vmatpush.msra.mxu0 %v1386
        %1404 = vmatpush.msra.mxu0 %v1385
        %1405 = vmatpush.msra.mxu0 %v1384
        %1406 = vmatpush.msra.mxu0 %v1383
        %1407 = vmatpush.msra.mxu0 %v1382
        %1408 = vmatpush.msra.mxu0 %v1381
        %1409 = vmatpush.msra.mxu0 %v1380
        %1410 = vmatpush.msra.mxu0 %v1379
        %1411 = vmatmul.f32.gmra.mxu0 %v1370
        %v1412 = vpop.f32.mrf.mxu0
        %v1413 = vadd.f32 0.0, %v1412
        %1414 = vmatmul.f32.gmra.mxu0 %v1371
        %v1415 = vpop.f32.mrf.mxu0
        %v1416 = vadd.f32 0.0, %v1415
        %1417 = vmatmul.f32.gmra.mxu0 %v1372
        %v1418 = vpop.f32.mrf.mxu0
        %v1419 = vadd.f32 0.0, %v1418
        %1420 = vmatmul.f32.gmra.mxu0 %v1373
        %v1421 = vpop.f32.mrf.mxu0
        %v1422 = vadd.f32 0.0, %v1421
        %1423 = vmatmul.f32.gmra.mxu0 %v1374
        %v1424 = vpop.f32.mrf.mxu0
        %v1425 = vadd.f32 0.0, %v1424
        %1426 = vmatmul.f32.gmra.mxu0 %v1375
        %v1427 = vpop.f32.mrf.mxu0
        %v1428 = vadd.f32 0.0, %v1427
        %1429 = vmatmul.f32.gmra.mxu0 %v1376
        %v1430 = vpop.f32.mrf.mxu0
        %v1431 = vadd.f32 0.0, %v1430
        %1432 = vmatmul.f32.gmra.mxu0 %v1377
        %v1433 = vpop.f32.mrf.mxu0
        %v1434 = vadd.f32 0.0, %v1433
        %1435 = vdwg.mxu0
        %1436 = vmatpush.msra.mxu0 %v1368
        %1437 = vmatpush.msra.mxu0 %v1367
        %1438 = vmatpush.msra.mxu0 %v1366
        %1439 = vmatpush.msra.mxu0 %v1365
        %1440 = vmatpush.msra.mxu0 %v1364
        %1441 = vmatpush.msra.mxu0 %v1363
        %1442 = vmatpush.msra.mxu0 %v1362
        %1443 = vmatpush.msra.mxu0 %v1361
        %1444 = vmatpush.msra.mxu0 %v1360
        %1445 = vmatpush.msra.mxu0 %v1359
        %1446 = vmatpush.msra.mxu0 %v1358
        %1447 = vmatpush.msra.mxu0 %v1357
        %1448 = vmatpush.msra.mxu0 %v1356
        %1449 = vmatpush.msra.mxu0 %v1355
        %1450 = vmatpush.msra.mxu0 %v1354
        %1451 = vmatpush.msra.mxu0 %v1353
        %1452 = vmatmul.f32.gmra.mxu0 %v1345
        %v1453 = vpop.f32.mrf.mxu0
        %v1454 = vadd.f32 %v1413, %v1453
        %1455 = vmatmul.f32.gmra.mxu0 %v1346
        %v1456 = vpop.f32.mrf.mxu0
        %v1457 = vadd.f32 %v1416, %v1456
        %1458 = vmatmul.f32.gmra.mxu0 %v1347
        %v1459 = vpop.f32.mrf.mxu0
        %v1460 = vadd.f32 %v1419, %v1459
        %1461 = vmatmul.f32.gmra.mxu0 %v1348
        %v1462 = vpop.f32.mrf.mxu0
        %v1463 = vadd.f32 %v1422, %v1462
        %1464 = vmatmul.f32.gmra.mxu0 %v1349
        %v1465 = vpop.f32.mrf.mxu0
        %v1466 = vadd.f32 %v1425, %v1465
        %1467 = vmatmul.f32.gmra.mxu0 %v1350
        %v1468 = vpop.f32.mrf.mxu0
        %v1469 = vadd.f32 %v1428, %v1468
        %1470 = vmatmul.f32.gmra.mxu0 %v1351
        %v1471 = vpop.f32.mrf.mxu0
        %v1472 = vadd.f32 %v1431, %v1471
        %1473 = vmatmul.f32.gmra.mxu0 %v1352
        %v1474 = vpop.f32.mrf.mxu0
        %v1475 = vadd.f32 %v1434, %v1474
        %1476 = vdwg.mxu0
        %v1477 = vld [vmem:[#allocation2 + $0x1] sm:$0xff]
        %v1478 = vld [vmem:[#allocation2 + $0x11] sm:$0xff]
        %v1479 = vld [vmem:[#allocation2 + $0x21] sm:$0xff]
        %v1480 = vld [vmem:[#allocation2 + $0x31] sm:$0xff]
        %v1481 = vld [vmem:[#allocation2 + $0x41] sm:$0xff]
        %v1482 = vld [vmem:[#allocation2 + $0x51] sm:$0xff]
        %v1483 = vld [vmem:[#allocation2 + $0x61] sm:$0xff]
        %v1484 = vld [vmem:[#allocation2 + $0x71] sm:$0xff]
        %s1485 = scalar_lea.vmem [#allocation6], 256
        %v1486 = vld [vmem:[%s1485] sm:$0xff]
        %v1487 = vld [vmem:[%s1485 + $0x8] sm:$0xff]
        %v1488 = vld [vmem:[%s1485 + $0x10] sm:$0xff]
        %v1489 = vld [vmem:[%s1485 + $0x18] sm:$0xff]
        %v1490 = vld [vmem:[%s1485 + $0x20] sm:$0xff]
        %v1491 = vld [vmem:[%s1485 + $0x28] sm:$0xff]
        %v1492 = vld [vmem:[%s1485 + $0x30] sm:$0xff]
        %v1493 = vld [vmem:[%s1485 + $0x38] sm:$0xff]
        %v1494 = vld [vmem:[%s1485 + $0x40] sm:$0xff]
        %v1495 = vld [vmem:[%s1485 + $0x48] sm:$0xff]
        %v1496 = vld [vmem:[%s1485 + $0x50] sm:$0xff]
        %v1497 = vld [vmem:[%s1485 + $0x58] sm:$0xff]
        %v1498 = vld [vmem:[%s1485 + $0x60] sm:$0xff]
        %v1499 = vld [vmem:[%s1485 + $0x68] sm:$0xff]
        %v1500 = vld [vmem:[%s1485 + $0x70] sm:$0xff]
        %v1501 = vld [vmem:[%s1485 + $0x78] sm:$0xff]
        %1502 = vmatpush.msra.mxu0 %v1501
        %1503 = vmatpush.msra.mxu0 %v1500
        %1504 = vmatpush.msra.mxu0 %v1499
        %1505 = vmatpush.msra.mxu0 %v1498
        %1506 = vmatpush.msra.mxu0 %v1497
        %1507 = vmatpush.msra.mxu0 %v1496
        %1508 = vmatpush.msra.mxu0 %v1495
        %1509 = vmatpush.msra.mxu0 %v1494
        %1510 = vmatpush.msra.mxu0 %v1493
        %1511 = vmatpush.msra.mxu0 %v1492
        %1512 = vmatpush.msra.mxu0 %v1491
        %1513 = vmatpush.msra.mxu0 %v1490
        %1514 = vmatpush.msra.mxu0 %v1489
        %1515 = vmatpush.msra.mxu0 %v1488
        %1516 = vmatpush.msra.mxu0 %v1487
        %1517 = vmatpush.msra.mxu0 %v1486
        %1518 = vmatmul.f32.gmra.mxu0 %v1477
        %v1519 = vpop.f32.mrf.mxu0
        %v1520 = vadd.f32 0.0, %v1519
        %1521 = vmatmul.f32.gmra.mxu0 %v1478
        %v1522 = vpop.f32.mrf.mxu0
        %v1523 = vadd.f32 0.0, %v1522
        %1524 = vmatmul.f32.gmra.mxu0 %v1479
        %v1525 = vpop.f32.mrf.mxu0
        %v1526 = vadd.f32 0.0, %v1525
        %1527 = vmatmul.f32.gmra.mxu0 %v1480
        %v1528 = vpop.f32.mrf.mxu0
        %v1529 = vadd.f32 0.0, %v1528
        %1530 = vmatmul.f32.gmra.mxu0 %v1481
        %v1531 = vpop.f32.mrf.mxu0
        %v1532 = vadd.f32 0.0, %v1531
        %1533 = vmatmul.f32.gmra.mxu0 %v1482
        %v1534 = vpop.f32.mrf.mxu0
        %v1535 = vadd.f32 0.0, %v1534
        %1536 = vmatmul.f32.gmra.mxu0 %v1483
        %v1537 = vpop.f32.mrf.mxu0
        %v1538 = vadd.f32 0.0, %v1537
        %1539 = vmatmul.f32.gmra.mxu0 %v1484
        %v1540 = vpop.f32.mrf.mxu0
        %v1541 = vadd.f32 0.0, %v1540
        %1542 = vdwg.mxu0
        %v1543 = vadd.f32 %v1454, %v1520
        %v1544 = vadd.f32 %v1457, %v1523
        %v1545 = vadd.f32 %v1460, %v1526
        %v1546 = vadd.f32 %v1463, %v1529
        %v1547 = vadd.f32 %v1466, %v1532
        %v1548 = vadd.f32 %v1469, %v1535
        %v1549 = vadd.f32 %v1472, %v1538
        %v1550 = vadd.f32 %v1475, %v1541
        %s1551 = scalar_lea.vmem [#allocation2], 288
        %v1552 = vld [vmem:[%s1551] sm:$0xff]
        %v1553 = vld [vmem:[%s1551 + $0x10] sm:$0xff]
        %v1554 = vld [vmem:[%s1551 + $0x20] sm:$0xff]
        %v1555 = vld [vmem:[%s1551 + $0x30] sm:$0xff]
        %v1556 = vld [vmem:[%s1551 + $0x40] sm:$0xff]
        %v1557 = vld [vmem:[%s1551 + $0x50] sm:$0xff]
        %v1558 = vld [vmem:[%s1551 + $0x60] sm:$0xff]
        %v1559 = vld [vmem:[%s1551 + $0x70] sm:$0xff]
        %s1560 = scalar_lea.vmem [#allocation6], 384
        %v1561 = vld [vmem:[%s1560] sm:$0xff]
        %v1562 = vld [vmem:[%s1560 + $0x8] sm:$0xff]
        %v1563 = vld [vmem:[%s1560 + $0x10] sm:$0xff]
        %v1564 = vld [vmem:[%s1560 + $0x18] sm:$0xff]
        %v1565 = vld [vmem:[%s1560 + $0x20] sm:$0xff]
        %v1566 = vld [vmem:[%s1560 + $0x28] sm:$0xff]
        %v1567 = vld [vmem:[%s1560 + $0x30] sm:$0xff]
        %v1568 = vld [vmem:[%s1560 + $0x38] sm:$0xff]
        %v1569 = vld [vmem:[%s1560 + $0x40] sm:$0xff]
        %v1570 = vld [vmem:[%s1560 + $0x48] sm:$0xff]
        %v1571 = vld [vmem:[%s1560 + $0x50] sm:$0xff]
        %v1572 = vld [vmem:[%s1560 + $0x58] sm:$0xff]
        %v1573 = vld [vmem:[%s1560 + $0x60] sm:$0xff]
        %v1574 = vld [vmem:[%s1560 + $0x68] sm:$0xff]
        %v1575 = vld [vmem:[%s1560 + $0x70] sm:$0xff]
        %v1576 = vld [vmem:[%s1560 + $0x78] sm:$0xff]
        %1577 = vmatpush.msra.mxu0 %v1576
        %1578 = vmatpush.msra.mxu0 %v1575
        %1579 = vmatpush.msra.mxu0 %v1574
        %1580 = vmatpush.msra.mxu0 %v1573
        %1581 = vmatpush.msra.mxu0 %v1572
        %1582 = vmatpush.msra.mxu0 %v1571
        %1583 = vmatpush.msra.mxu0 %v1570
        %1584 = vmatpush.msra.mxu0 %v1569
        %1585 = vmatpush.msra.mxu0 %v1568
        %1586 = vmatpush.msra.mxu0 %v1567
        %1587 = vmatpush.msra.mxu0 %v1566
        %1588 = vmatpush.msra.mxu0 %v1565
        %1589 = vmatpush.msra.mxu0 %v1564
        %1590 = vmatpush.msra.mxu0 %v1563
        %1591 = vmatpush.msra.mxu0 %v1562
        %1592 = vmatpush.msra.mxu0 %v1561
        %1593 = vmatmul.f32.gmra.mxu0 %v1552
        %v1594 = vpop.f32.mrf.mxu0
        %v1595 = vadd.f32 0.0, %v1594
        %1596 = vmatmul.f32.gmra.mxu0 %v1553
        %v1597 = vpop.f32.mrf.mxu0
        %v1598 = vadd.f32 0.0, %v1597
        %1599 = vmatmul.f32.gmra.mxu0 %v1554
        %v1600 = vpop.f32.mrf.mxu0
        %v1601 = vadd.f32 0.0, %v1600
        %1602 = vmatmul.f32.gmra.mxu0 %v1555
        %v1603 = vpop.f32.mrf.mxu0
        %v1604 = vadd.f32 0.0, %v1603
        %1605 = vmatmul.f32.gmra.mxu0 %v1556
        %v1606 = vpop.f32.mrf.mxu0
        %v1607 = vadd.f32 0.0, %v1606
        %1608 = vmatmul.f32.gmra.mxu0 %v1557
        %v1609 = vpop.f32.mrf.mxu0
        %v1610 = vadd.f32 0.0, %v1609
        %1611 = vmatmul.f32.gmra.mxu0 %v1558
        %v1612 = vpop.f32.mrf.mxu0
        %v1613 = vadd.f32 0.0, %v1612
        %1614 = vmatmul.f32.gmra.mxu0 %v1559
        %v1615 = vpop.f32.mrf.mxu0
        %v1616 = vadd.f32 0.0, %v1615
        %1617 = vdwg.mxu0
        %v1618 = vadd.f32 %v1543, %v1595
        %v1619 = vadd.f32 %v1544, %v1598
        %v1620 = vadd.f32 %v1545, %v1601
        %v1621 = vadd.f32 %v1546, %v1604
        %v1622 = vadd.f32 %v1547, %v1607
        %v1623 = vadd.f32 %v1548, %v1610
        %v1624 = vadd.f32 %v1549, %v1613
        %v1625 = vadd.f32 %v1550, %v1616
        %s1626 = scalar_lea.vmem [#allocation2], 432
        %v1627 = vld [vmem:[%s1626] sm:$0xff]
        %v1628 = vld [vmem:[%s1626 + $0x10] sm:$0xff]
        %v1629 = vld [vmem:[%s1626 + $0x20] sm:$0xff]
        %v1630 = vld [vmem:[%s1626 + $0x30] sm:$0xff]
        %v1631 = vld [vmem:[%s1626 + $0x40] sm:$0xff]
        %v1632 = vld [vmem:[%s1626 + $0x50] sm:$0xff]
        %v1633 = vld [vmem:[%s1626 + $0x60] sm:$0xff]
        %v1634 = vld [vmem:[%s1626 + $0x70] sm:$0xff]
        %s1635 = scalar_lea.vmem [#allocation6], 512
        %v1636 = vld [vmem:[%s1635] sm:$0xff]
        %v1637 = vld [vmem:[%s1635 + $0x8] sm:$0xff]
        %v1638 = vld [vmem:[%s1635 + $0x10] sm:$0xff]
        %v1639 = vld [vmem:[%s1635 + $0x18] sm:$0xff]
        %v1640 = vld [vmem:[%s1635 + $0x20] sm:$0xff]
        %v1641 = vld [vmem:[%s1635 + $0x28] sm:$0xff]
        %v1642 = vld [vmem:[%s1635 + $0x30] sm:$0xff]
        %v1643 = vld [vmem:[%s1635 + $0x38] sm:$0xff]
        %v1644 = vld [vmem:[%s1635 + $0x40] sm:$0xff]
        %v1645 = vld [vmem:[%s1635 + $0x48] sm:$0xff]
        %v1646 = vld [vmem:[%s1635 + $0x50] sm:$0xff]
        %v1647 = vld [vmem:[%s1635 + $0x58] sm:$0xff]
        %v1648 = vld [vmem:[%s1635 + $0x60] sm:$0xff]
        %v1649 = vld [vmem:[%s1635 + $0x68] sm:$0xff]
        %v1650 = vld [vmem:[%s1635 + $0x70] sm:$0xff]
        %v1651 = vld [vmem:[%s1635 + $0x78] sm:$0xff]
        %1652 = vmatpush.msra.mxu0 %v1651
        %1653 = vmatpush.msra.mxu0 %v1650
        %1654 = vmatpush.msra.mxu0 %v1649
        %1655 = vmatpush.msra.mxu0 %v1648
        %1656 = vmatpush.msra.mxu0 %v1647
        %1657 = vmatpush.msra.mxu0 %v1646
        %1658 = vmatpush.msra.mxu0 %v1645
        %1659 = vmatpush.msra.mxu0 %v1644
        %1660 = vmatpush.msra.mxu0 %v1643
        %1661 = vmatpush.msra.mxu0 %v1642
        %1662 = vmatpush.msra.mxu0 %v1641
        %1663 = vmatpush.msra.mxu0 %v1640
        %1664 = vmatpush.msra.mxu0 %v1639
        %1665 = vmatpush.msra.mxu0 %v1638
        %1666 = vmatpush.msra.mxu0 %v1637
        %1667 = vmatpush.msra.mxu0 %v1636
        %1668 = vmatmul.f32.gmra.mxu0 %v1627
        %v1669 = vpop.f32.mrf.mxu0
        %v1670 = vadd.f32 0.0, %v1669
        %1671 = vmatmul.f32.gmra.mxu0 %v1628
        %v1672 = vpop.f32.mrf.mxu0
        %v1673 = vadd.f32 0.0, %v1672
        %1674 = vmatmul.f32.gmra.mxu0 %v1629
        %v1675 = vpop.f32.mrf.mxu0
        %v1676 = vadd.f32 0.0, %v1675
        %1677 = vmatmul.f32.gmra.mxu0 %v1630
        %v1678 = vpop.f32.mrf.mxu0
        %v1679 = vadd.f32 0.0, %v1678
        %1680 = vmatmul.f32.gmra.mxu0 %v1631
        %v1681 = vpop.f32.mrf.mxu0
        %v1682 = vadd.f32 0.0, %v1681
        %1683 = vmatmul.f32.gmra.mxu0 %v1632
        %v1684 = vpop.f32.mrf.mxu0
        %v1685 = vadd.f32 0.0, %v1684
        %1686 = vmatmul.f32.gmra.mxu0 %v1633
        %v1687 = vpop.f32.mrf.mxu0
        %v1688 = vadd.f32 0.0, %v1687
        %1689 = vmatmul.f32.gmra.mxu0 %v1634
        %v1690 = vpop.f32.mrf.mxu0
        %v1691 = vadd.f32 0.0, %v1690
        %1692 = vdwg.mxu0
        %v1693 = vadd.f32 %v1618, %v1670
        %v1694 = vadd.f32 %v1619, %v1673
        %v1695 = vadd.f32 %v1620, %v1676
        %v1696 = vadd.f32 %v1621, %v1679
        %v1697 = vadd.f32 %v1622, %v1682
        %v1698 = vadd.f32 %v1623, %v1685
        %v1699 = vadd.f32 %v1624, %v1688
        %v1700 = vadd.f32 %v1625, %v1691
        %v1701 = vld [vmem:[%s1551 + $0x1] sm:$0xff]
        %v1702 = vld [vmem:[%s1551 + $0x11] sm:$0xff]
        %v1703 = vld [vmem:[%s1551 + $0x21] sm:$0xff]
        %v1704 = vld [vmem:[%s1551 + $0x31] sm:$0xff]
        %v1705 = vld [vmem:[%s1551 + $0x41] sm:$0xff]
        %v1706 = vld [vmem:[%s1551 + $0x51] sm:$0xff]
        %v1707 = vld [vmem:[%s1551 + $0x61] sm:$0xff]
        %v1708 = vld [vmem:[%s1551 + $0x71] sm:$0xff]
        %s1709 = scalar_lea.vmem [#allocation6], 640
        %v1710 = vld [vmem:[%s1709] sm:$0xff]
        %v1711 = vld [vmem:[%s1709 + $0x8] sm:$0xff]
        %v1712 = vld [vmem:[%s1709 + $0x10] sm:$0xff]
        %v1713 = vld [vmem:[%s1709 + $0x18] sm:$0xff]
        %v1714 = vld [vmem:[%s1709 + $0x20] sm:$0xff]
        %v1715 = vld [vmem:[%s1709 + $0x28] sm:$0xff]
        %v1716 = vld [vmem:[%s1709 + $0x30] sm:$0xff]
        %v1717 = vld [vmem:[%s1709 + $0x38] sm:$0xff]
        %v1718 = vld [vmem:[%s1709 + $0x40] sm:$0xff]
        %v1719 = vld [vmem:[%s1709 + $0x48] sm:$0xff]
        %v1720 = vld [vmem:[%s1709 + $0x50] sm:$0xff]
        %v1721 = vld [vmem:[%s1709 + $0x58] sm:$0xff]
        %v1722 = vld [vmem:[%s1709 + $0x60] sm:$0xff]
        %v1723 = vld [vmem:[%s1709 + $0x68] sm:$0xff]
        %v1724 = vld [vmem:[%s1709 + $0x70] sm:$0xff]
        %v1725 = vld [vmem:[%s1709 + $0x78] sm:$0xff]
        %1726 = vmatpush.msra.mxu0 %v1725
        %1727 = vmatpush.msra.mxu0 %v1724
        %1728 = vmatpush.msra.mxu0 %v1723
        %1729 = vmatpush.msra.mxu0 %v1722
        %1730 = vmatpush.msra.mxu0 %v1721
        %1731 = vmatpush.msra.mxu0 %v1720
        %1732 = vmatpush.msra.mxu0 %v1719
        %1733 = vmatpush.msra.mxu0 %v1718
        %1734 = vmatpush.msra.mxu0 %v1717
        %1735 = vmatpush.msra.mxu0 %v1716
        %1736 = vmatpush.msra.mxu0 %v1715
        %1737 = vmatpush.msra.mxu0 %v1714
        %1738 = vmatpush.msra.mxu0 %v1713
        %1739 = vmatpush.msra.mxu0 %v1712
        %1740 = vmatpush.msra.mxu0 %v1711
        %1741 = vmatpush.msra.mxu0 %v1710
        %1742 = vmatmul.f32.gmra.mxu0 %v1701
        %v1743 = vpop.f32.mrf.mxu0
        %v1744 = vadd.f32 0.0, %v1743
        %1745 = vmatmul.f32.gmra.mxu0 %v1702
        %v1746 = vpop.f32.mrf.mxu0
        %v1747 = vadd.f32 0.0, %v1746
        %1748 = vmatmul.f32.gmra.mxu0 %v1703
        %v1749 = vpop.f32.mrf.mxu0
        %v1750 = vadd.f32 0.0, %v1749
        %1751 = vmatmul.f32.gmra.mxu0 %v1704
        %v1752 = vpop.f32.mrf.mxu0
        %v1753 = vadd.f32 0.0, %v1752
        %1754 = vmatmul.f32.gmra.mxu0 %v1705
        %v1755 = vpop.f32.mrf.mxu0
        %v1756 = vadd.f32 0.0, %v1755
        %1757 = vmatmul.f32.gmra.mxu0 %v1706
        %v1758 = vpop.f32.mrf.mxu0
        %v1759 = vadd.f32 0.0, %v1758
        %1760 = vmatmul.f32.gmra.mxu0 %v1707
        %v1761 = vpop.f32.mrf.mxu0
        %v1762 = vadd.f32 0.0, %v1761
        %1763 = vmatmul.f32.gmra.mxu0 %v1708
        %v1764 = vpop.f32.mrf.mxu0
        %v1765 = vadd.f32 0.0, %v1764
        %1766 = vdwg.mxu0
        %v1767 = vadd.f32 %v1693, %v1744
        %v1768 = vadd.f32 %v1694, %v1747
        %v1769 = vadd.f32 %v1695, %v1750
        %v1770 = vadd.f32 %v1696, %v1753
        %v1771 = vadd.f32 %v1697, %v1756
        %v1772 = vadd.f32 %v1698, %v1759
        %v1773 = vadd.f32 %v1699, %v1762
        %v1774 = vadd.f32 %v1700, %v1765
        %s1775 = scalar_lea.vmem [#allocation2], 16
        %v1776 = vld [vmem:[%s1775] sm:$0xff]
        %v1777 = vld [vmem:[%s1775 + $0x10] sm:$0xff]
        %v1778 = vld [vmem:[%s1775 + $0x20] sm:$0xff]
        %v1779 = vld [vmem:[%s1775 + $0x30] sm:$0xff]
        %v1780 = vld [vmem:[%s1775 + $0x40] sm:$0xff]
        %v1781 = vld [vmem:[%s1775 + $0x50] sm:$0xff]
        %v1782 = vld [vmem:[%s1775 + $0x60] sm:$0xff]
        %v1783 = vld [vmem:[%s1775 + $0x70] sm:$0xff]
        %s1784 = scalar_lea.vmem [#allocation6], 768
        %v1785 = vld [vmem:[%s1784] sm:$0xff]
        %v1786 = vld [vmem:[%s1784 + $0x8] sm:$0xff]
        %v1787 = vld [vmem:[%s1784 + $0x10] sm:$0xff]
        %v1788 = vld [vmem:[%s1784 + $0x18] sm:$0xff]
        %v1789 = vld [vmem:[%s1784 + $0x20] sm:$0xff]
        %v1790 = vld [vmem:[%s1784 + $0x28] sm:$0xff]
        %v1791 = vld [vmem:[%s1784 + $0x30] sm:$0xff]
        %v1792 = vld [vmem:[%s1784 + $0x38] sm:$0xff]
        %v1793 = vld [vmem:[%s1784 + $0x40] sm:$0xff]
        %v1794 = vld [vmem:[%s1784 + $0x48] sm:$0xff]
        %v1795 = vld [vmem:[%s1784 + $0x50] sm:$0xff]
        %v1796 = vld [vmem:[%s1784 + $0x58] sm:$0xff]
        %v1797 = vld [vmem:[%s1784 + $0x60] sm:$0xff]
        %v1798 = vld [vmem:[%s1784 + $0x68] sm:$0xff]
        %v1799 = vld [vmem:[%s1784 + $0x70] sm:$0xff]
        %v1800 = vld [vmem:[%s1784 + $0x78] sm:$0xff]
        %1801 = vmatpush.msra.mxu0 %v1800
        %1802 = vmatpush.msra.mxu0 %v1799
        %1803 = vmatpush.msra.mxu0 %v1798
        %1804 = vmatpush.msra.mxu0 %v1797
        %1805 = vmatpush.msra.mxu0 %v1796
        %1806 = vmatpush.msra.mxu0 %v1795
        %1807 = vmatpush.msra.mxu0 %v1794
        %1808 = vmatpush.msra.mxu0 %v1793
        %1809 = vmatpush.msra.mxu0 %v1792
        %1810 = vmatpush.msra.mxu0 %v1791
        %1811 = vmatpush.msra.mxu0 %v1790
        %1812 = vmatpush.msra.mxu0 %v1789
        %1813 = vmatpush.msra.mxu0 %v1788
        %1814 = vmatpush.msra.mxu0 %v1787
        %1815 = vmatpush.msra.mxu0 %v1786
        %1816 = vmatpush.msra.mxu0 %v1785
        %1817 = vmatmul.f32.gmra.mxu0 %v1776
        %v1818 = vpop.f32.mrf.mxu0
        %v1819 = vadd.f32 0.0, %v1818
        %1820 = vmatmul.f32.gmra.mxu0 %v1777
        %v1821 = vpop.f32.mrf.mxu0
        %v1822 = vadd.f32 0.0, %v1821
        %1823 = vmatmul.f32.gmra.mxu0 %v1778
        %v1824 = vpop.f32.mrf.mxu0
        %v1825 = vadd.f32 0.0, %v1824
        %1826 = vmatmul.f32.gmra.mxu0 %v1779
        %v1827 = vpop.f32.mrf.mxu0
        %v1828 = vadd.f32 0.0, %v1827
        %1829 = vmatmul.f32.gmra.mxu0 %v1780
        %v1830 = vpop.f32.mrf.mxu0
        %v1831 = vadd.f32 0.0, %v1830
        %1832 = vmatmul.f32.gmra.mxu0 %v1781
        %v1833 = vpop.f32.mrf.mxu0
        %v1834 = vadd.f32 0.0, %v1833
        %1835 = vmatmul.f32.gmra.mxu0 %v1782
        %v1836 = vpop.f32.mrf.mxu0
        %v1837 = vadd.f32 0.0, %v1836
        %1838 = vmatmul.f32.gmra.mxu0 %v1783
        %v1839 = vpop.f32.mrf.mxu0
        %v1840 = vadd.f32 0.0, %v1839
        %1841 = vdwg.mxu0
        %v1842 = vadd.f32 %v1767, %v1819
        %v1843 = vadd.f32 %v1768, %v1822
        %v1844 = vadd.f32 %v1769, %v1825
        %v1845 = vadd.f32 %v1770, %v1828
        %v1846 = vadd.f32 %v1771, %v1831
        %v1847 = vadd.f32 %v1772, %v1834
        %v1848 = vadd.f32 %v1773, %v1837
        %v1849 = vadd.f32 %v1774, %v1840
        %s1850 = scalar_lea.vmem [#allocation2], 160
        %v1851 = vld [vmem:[%s1850] sm:$0xff]
        %v1852 = vld [vmem:[%s1850 + $0x10] sm:$0xff]
        %v1853 = vld [vmem:[%s1850 + $0x20] sm:$0xff]
        %v1854 = vld [vmem:[%s1850 + $0x30] sm:$0xff]
        %v1855 = vld [vmem:[%s1850 + $0x40] sm:$0xff]
        %v1856 = vld [vmem:[%s1850 + $0x50] sm:$0xff]
        %v1857 = vld [vmem:[%s1850 + $0x60] sm:$0xff]
        %v1858 = vld [vmem:[%s1850 + $0x70] sm:$0xff]
        %s1859 = scalar_lea.vmem [#allocation6], 896
        %v1860 = vld [vmem:[%s1859] sm:$0xff]
        %v1861 = vld [vmem:[%s1859 + $0x8] sm:$0xff]
        %v1862 = vld [vmem:[%s1859 + $0x10] sm:$0xff]
        %v1863 = vld [vmem:[%s1859 + $0x18] sm:$0xff]
        %v1864 = vld [vmem:[%s1859 + $0x20] sm:$0xff]
        %v1865 = vld [vmem:[%s1859 + $0x28] sm:$0xff]
        %v1866 = vld [vmem:[%s1859 + $0x30] sm:$0xff]
        %v1867 = vld [vmem:[%s1859 + $0x38] sm:$0xff]
        %v1868 = vld [vmem:[%s1859 + $0x40] sm:$0xff]
        %v1869 = vld [vmem:[%s1859 + $0x48] sm:$0xff]
        %v1870 = vld [vmem:[%s1859 + $0x50] sm:$0xff]
        %v1871 = vld [vmem:[%s1859 + $0x58] sm:$0xff]
        %v1872 = vld [vmem:[%s1859 + $0x60] sm:$0xff]
        %v1873 = vld [vmem:[%s1859 + $0x68] sm:$0xff]
        %v1874 = vld [vmem:[%s1859 + $0x70] sm:$0xff]
        %v1875 = vld [vmem:[%s1859 + $0x78] sm:$0xff]
        %1876 = vmatpush.msra.mxu0 %v1875
        %1877 = vmatpush.msra.mxu0 %v1874
        %1878 = vmatpush.msra.mxu0 %v1873
        %1879 = vmatpush.msra.mxu0 %v1872
        %1880 = vmatpush.msra.mxu0 %v1871
        %1881 = vmatpush.msra.mxu0 %v1870
        %1882 = vmatpush.msra.mxu0 %v1869
        %1883 = vmatpush.msra.mxu0 %v1868
        %1884 = vmatpush.msra.mxu0 %v1867
        %1885 = vmatpush.msra.mxu0 %v1866
        %1886 = vmatpush.msra.mxu0 %v1865
        %1887 = vmatpush.msra.mxu0 %v1864
        %1888 = vmatpush.msra.mxu0 %v1863
        %1889 = vmatpush.msra.mxu0 %v1862
        %1890 = vmatpush.msra.mxu0 %v1861
        %1891 = vmatpush.msra.mxu0 %v1860
        %1892 = vmatmul.f32.gmra.mxu0 %v1851
        %v1893 = vpop.f32.mrf.mxu0
        %v1894 = vadd.f32 0.0, %v1893
        %1895 = vmatmul.f32.gmra.mxu0 %v1852
        %v1896 = vpop.f32.mrf.mxu0
        %v1897 = vadd.f32 0.0, %v1896
        %1898 = vmatmul.f32.gmra.mxu0 %v1853
        %v1899 = vpop.f32.mrf.mxu0
        %v1900 = vadd.f32 0.0, %v1899
        %1901 = vmatmul.f32.gmra.mxu0 %v1854
        %v1902 = vpop.f32.mrf.mxu0
        %v1903 = vadd.f32 0.0, %v1902
        %1904 = vmatmul.f32.gmra.mxu0 %v1855
        %v1905 = vpop.f32.mrf.mxu0
        %v1906 = vadd.f32 0.0, %v1905
        %1907 = vmatmul.f32.gmra.mxu0 %v1856
        %v1908 = vpop.f32.mrf.mxu0
        %v1909 = vadd.f32 0.0, %v1908
        %1910 = vmatmul.f32.gmra.mxu0 %v1857
        %v1911 = vpop.f32.mrf.mxu0
        %v1912 = vadd.f32 0.0, %v1911
        %1913 = vmatmul.f32.gmra.mxu0 %v1858
        %v1914 = vpop.f32.mrf.mxu0
        %v1915 = vadd.f32 0.0, %v1914
        %1916 = vdwg.mxu0
        %v1917 = vadd.f32 %v1842, %v1894
        %v1918 = vadd.f32 %v1843, %v1897
        %v1919 = vadd.f32 %v1844, %v1900
        %v1920 = vadd.f32 %v1845, %v1903
        %v1921 = vadd.f32 %v1846, %v1906
        %v1922 = vadd.f32 %v1847, %v1909
        %v1923 = vadd.f32 %v1848, %v1912
        %v1924 = vadd.f32 %v1849, %v1915
        %v1925 = vld [vmem:[%s1775 + $0x1] sm:$0xff]
        %v1926 = vld [vmem:[%s1775 + $0x11] sm:$0xff]
        %v1927 = vld [vmem:[%s1775 + $0x21] sm:$0xff]
        %v1928 = vld [vmem:[%s1775 + $0x31] sm:$0xff]
        %v1929 = vld [vmem:[%s1775 + $0x41] sm:$0xff]
        %v1930 = vld [vmem:[%s1775 + $0x51] sm:$0xff]
        %v1931 = vld [vmem:[%s1775 + $0x61] sm:$0xff]
        %v1932 = vld [vmem:[%s1775 + $0x71] sm:$0xff]
        %s1933 = scalar_lea.vmem [#allocation6], 1024
        %v1934 = vld [vmem:[%s1933] sm:$0xff]
        %v1935 = vld [vmem:[%s1933 + $0x8] sm:$0xff]
        %v1936 = vld [vmem:[%s1933 + $0x10] sm:$0xff]
        %v1937 = vld [vmem:[%s1933 + $0x18] sm:$0xff]
        %v1938 = vld [vmem:[%s1933 + $0x20] sm:$0xff]
        %v1939 = vld [vmem:[%s1933 + $0x28] sm:$0xff]
        %v1940 = vld [vmem:[%s1933 + $0x30] sm:$0xff]
        %v1941 = vld [vmem:[%s1933 + $0x38] sm:$0xff]
        %v1942 = vld [vmem:[%s1933 + $0x40] sm:$0xff]
        %v1943 = vld [vmem:[%s1933 + $0x48] sm:$0xff]
        %v1944 = vld [vmem:[%s1933 + $0x50] sm:$0xff]
        %v1945 = vld [vmem:[%s1933 + $0x58] sm:$0xff]
        %v1946 = vld [vmem:[%s1933 + $0x60] sm:$0xff]
        %v1947 = vld [vmem:[%s1933 + $0x68] sm:$0xff]
        %v1948 = vld [vmem:[%s1933 + $0x70] sm:$0xff]
        %v1949 = vld [vmem:[%s1933 + $0x78] sm:$0xff]
        %1950 = vmatpush.msra.mxu0 %v1949
        %1951 = vmatpush.msra.mxu0 %v1948
        %1952 = vmatpush.msra.mxu0 %v1947
        %1953 = vmatpush.msra.mxu0 %v1946
        %1954 = vmatpush.msra.mxu0 %v1945
        %1955 = vmatpush.msra.mxu0 %v1944
        %1956 = vmatpush.msra.mxu0 %v1943
        %1957 = vmatpush.msra.mxu0 %v1942
        %1958 = vmatpush.msra.mxu0 %v1941
        %1959 = vmatpush.msra.mxu0 %v1940
        %1960 = vmatpush.msra.mxu0 %v1939
        %1961 = vmatpush.msra.mxu0 %v1938
        %1962 = vmatpush.msra.mxu0 %v1937
        %1963 = vmatpush.msra.mxu0 %v1936
        %1964 = vmatpush.msra.mxu0 %v1935
        %1965 = vmatpush.msra.mxu0 %v1934
        %1966 = vmatmul.f32.gmra.mxu0 %v1925
        %v1967 = vpop.f32.mrf.mxu0
        %v1968 = vadd.f32 0.0, %v1967
        %1969 = vmatmul.f32.gmra.mxu0 %v1926
        %v1970 = vpop.f32.mrf.mxu0
        %v1971 = vadd.f32 0.0, %v1970
        %1972 = vmatmul.f32.gmra.mxu0 %v1927
        %v1973 = vpop.f32.mrf.mxu0
        %v1974 = vadd.f32 0.0, %v1973
        %1975 = vmatmul.f32.gmra.mxu0 %v1928
        %v1976 = vpop.f32.mrf.mxu0
        %v1977 = vadd.f32 0.0, %v1976
        %1978 = vmatmul.f32.gmra.mxu0 %v1929
        %v1979 = vpop.f32.mrf.mxu0
        %v1980 = vadd.f32 0.0, %v1979
        %1981 = vmatmul.f32.gmra.mxu0 %v1930
        %v1982 = vpop.f32.mrf.mxu0
        %v1983 = vadd.f32 0.0, %v1982
        %1984 = vmatmul.f32.gmra.mxu0 %v1931
        %v1985 = vpop.f32.mrf.mxu0
        %v1986 = vadd.f32 0.0, %v1985
        %1987 = vmatmul.f32.gmra.mxu0 %v1932
        %v1988 = vpop.f32.mrf.mxu0
        %v1989 = vadd.f32 0.0, %v1988
        %1990 = vdwg.mxu0
        %v1991 = vadd.f32 %v1917, %v1968
        %v1992 = vadd.f32 %v1918, %v1971
        %v1993 = vadd.f32 %v1919, %v1974
        %v1994 = vadd.f32 %v1920, %v1977
        %v1995 = vadd.f32 %v1921, %v1980
        %v1996 = vadd.f32 %v1922, %v1983
        %v1997 = vadd.f32 %v1923, %v1986
        %v1998 = vadd.f32 %v1924, %v1989
        %v1999 = vld [vmem:[%s5] sm:$0x1]
        %v2001 = vperm.slane %v1999, 0
        %v2003 = vadd.f32 %v1991, %v2001
        %v2004 = vadd.f32 %v1992, %v2001
        %v2005 = vadd.f32 %v1993, %v2001
        %v2006 = vadd.f32 %v1994, %v2001
        %v2007 = vadd.f32 %v1995, %v2001
        %v2008 = vadd.f32 %v1996, %v2001
        %v2009 = vadd.f32 %v1997, %v2001
        %v2010 = vadd.f32 %v1998, %v2001
        %v2011 = vmax.f32 %v2003, 0.0
        %v2012 = vmax.f32 %v2004, 0.0
        %v2013 = vmax.f32 %v2005, 0.0
        %v2014 = vmax.f32 %v2006, 0.0
        %v2015 = vmax.f32 %v2007, 0.0
        %v2016 = vmax.f32 %v2008, 0.0
        %v2017 = vmax.f32 %v2009, 0.0
        %v2018 = vmax.f32 %v2010, 0.0
        %v2019 = vld [vmem:[%s6] sm:$0xff]
        %v2020 = vld [vmem:[%s6 + $0x8] sm:$0xff]
        %v2021 = vld [vmem:[%s6 + $0x10] sm:$0xff]
        %v2022 = vld [vmem:[%s6 + $0x18] sm:$0xff]
        %v2023 = vld [vmem:[%s6 + $0x20] sm:$0xff]
        %v2024 = vld [vmem:[%s6 + $0x28] sm:$0xff]
        %v2025 = vld [vmem:[%s6 + $0x30] sm:$0xff]
        %v2026 = vld [vmem:[%s6 + $0x38] sm:$0xff]
        %v2027 = vld [vmem:[%s6 + $0x40] sm:$0xff]
        %v2028 = vld [vmem:[%s6 + $0x48] sm:$0xff]
        %v2029 = vld [vmem:[%s6 + $0x50] sm:$0xff]
        %v2030 = vld [vmem:[%s6 + $0x58] sm:$0xff]
        %v2031 = vld [vmem:[%s6 + $0x60] sm:$0xff]
        %v2032 = vld [vmem:[%s6 + $0x68] sm:$0xff]
        %v2033 = vld [vmem:[%s6 + $0x70] sm:$0xff]
        %v2034 = vld [vmem:[%s6 + $0x78] sm:$0xff]
        %s2035 = scalar_lea.vmem %s330, 432 [#allocation3]
        %v2036 = vld [vmem:[%s2035] sm:$0xff]
        %v2037 = vld [vmem:[%s2035 + $0x10] sm:$0xff]
        %v2038 = vld [vmem:[%s2035 + $0x20] sm:$0xff]
        %v2039 = vld [vmem:[%s2035 + $0x30] sm:$0xff]
        %v2040 = vld [vmem:[%s2035 + $0x40] sm:$0xff]
        %v2041 = vld [vmem:[%s2035 + $0x50] sm:$0xff]
        %v2042 = vld [vmem:[%s2035 + $0x60] sm:$0xff]
        %v2043 = vld [vmem:[%s2035 + $0x70] sm:$0xff]
        %v2044 = vld [vmem:[%s7] sm:$0xff]
        %v2045 = vld [vmem:[%s7 + $0x8] sm:$0xff]
        %v2046 = vld [vmem:[%s7 + $0x10] sm:$0xff]
        %v2047 = vld [vmem:[%s7 + $0x18] sm:$0xff]
        %v2048 = vld [vmem:[%s7 + $0x20] sm:$0xff]
        %v2049 = vld [vmem:[%s7 + $0x28] sm:$0xff]
        %v2050 = vld [vmem:[%s7 + $0x30] sm:$0xff]
        %v2051 = vld [vmem:[%s7 + $0x38] sm:$0xff]
        %v2052 = vld [vmem:[%s7 + $0x40] sm:$0xff]
        %v2053 = vld [vmem:[%s7 + $0x48] sm:$0xff]
        %v2054 = vld [vmem:[%s7 + $0x50] sm:$0xff]
        %v2055 = vld [vmem:[%s7 + $0x58] sm:$0xff]
        %v2056 = vld [vmem:[%s7 + $0x60] sm:$0xff]
        %v2057 = vld [vmem:[%s7 + $0x68] sm:$0xff]
        %v2058 = vld [vmem:[%s7 + $0x70] sm:$0xff]
        %v2059 = vld [vmem:[%s7 + $0x78] sm:$0xff]
        %2060 = vmatpush.msra.mxu0 %v2059
        %2061 = vmatpush.msra.mxu0 %v2058
        %2062 = vmatpush.msra.mxu0 %v2057
        %2063 = vmatpush.msra.mxu0 %v2056
        %2064 = vmatpush.msra.mxu0 %v2055
        %2065 = vmatpush.msra.mxu0 %v2054
        %2066 = vmatpush.msra.mxu0 %v2053
        %2067 = vmatpush.msra.mxu0 %v2052
        %2068 = vmatpush.msra.mxu0 %v2051
        %2069 = vmatpush.msra.mxu0 %v2050
        %2070 = vmatpush.msra.mxu0 %v2049
        %2071 = vmatpush.msra.mxu0 %v2048
        %2072 = vmatpush.msra.mxu0 %v2047
        %2073 = vmatpush.msra.mxu0 %v2046
        %2074 = vmatpush.msra.mxu0 %v2045
        %2075 = vmatpush.msra.mxu0 %v2044
        %2076 = vmatmul.f32.gmra.mxu0 %v2036
        %v2077 = vpop.f32.mrf.mxu0
        %v2078 = vadd.f32 0.0, %v2077
        %2079 = vmatmul.f32.gmra.mxu0 %v2037
        %v2080 = vpop.f32.mrf.mxu0
        %v2081 = vadd.f32 0.0, %v2080
        %2082 = vmatmul.f32.gmra.mxu0 %v2038
        %v2083 = vpop.f32.mrf.mxu0
        %v2084 = vadd.f32 0.0, %v2083
        %2085 = vmatmul.f32.gmra.mxu0 %v2039
        %v2086 = vpop.f32.mrf.mxu0
        %v2087 = vadd.f32 0.0, %v2086
        %2088 = vmatmul.f32.gmra.mxu0 %v2040
        %v2089 = vpop.f32.mrf.mxu0
        %v2090 = vadd.f32 0.0, %v2089
        %2091 = vmatmul.f32.gmra.mxu0 %v2041
        %v2092 = vpop.f32.mrf.mxu0
        %v2093 = vadd.f32 0.0, %v2092
        %2094 = vmatmul.f32.gmra.mxu0 %v2042
        %v2095 = vpop.f32.mrf.mxu0
        %v2096 = vadd.f32 0.0, %v2095
        %2097 = vmatmul.f32.gmra.mxu0 %v2043
        %v2098 = vpop.f32.mrf.mxu0
        %v2099 = vadd.f32 0.0, %v2098
        %2100 = vdwg.mxu0
        %2101 = vmatpush.msra.mxu0 %v2034
        %2102 = vmatpush.msra.mxu0 %v2033
        %2103 = vmatpush.msra.mxu0 %v2032
        %2104 = vmatpush.msra.mxu0 %v2031
        %2105 = vmatpush.msra.mxu0 %v2030
        %2106 = vmatpush.msra.mxu0 %v2029
        %2107 = vmatpush.msra.mxu0 %v2028
        %2108 = vmatpush.msra.mxu0 %v2027
        %2109 = vmatpush.msra.mxu0 %v2026
        %2110 = vmatpush.msra.mxu0 %v2025
        %2111 = vmatpush.msra.mxu0 %v2024
        %2112 = vmatpush.msra.mxu0 %v2023
        %2113 = vmatpush.msra.mxu0 %v2022
        %2114 = vmatpush.msra.mxu0 %v2021
        %2115 = vmatpush.msra.mxu0 %v2020
        %2116 = vmatpush.msra.mxu0 %v2019
        %2117 = vmatmul.f32.gmra.mxu0 %v2011
        %v2118 = vpop.f32.mrf.mxu0
        %v2119 = vadd.f32 %v2078, %v2118
        %2120 = vmatmul.f32.gmra.mxu0 %v2012
        %v2121 = vpop.f32.mrf.mxu0
        %v2122 = vadd.f32 %v2081, %v2121
        %2123 = vmatmul.f32.gmra.mxu0 %v2013
        %v2124 = vpop.f32.mrf.mxu0
        %v2125 = vadd.f32 %v2084, %v2124
        %2126 = vmatmul.f32.gmra.mxu0 %v2014
        %v2127 = vpop.f32.mrf.mxu0
        %v2128 = vadd.f32 %v2087, %v2127
        %2129 = vmatmul.f32.gmra.mxu0 %v2015
        %v2130 = vpop.f32.mrf.mxu0
        %v2131 = vadd.f32 %v2090, %v2130
        %2132 = vmatmul.f32.gmra.mxu0 %v2016
        %v2133 = vpop.f32.mrf.mxu0
        %v2134 = vadd.f32 %v2093, %v2133
        %2135 = vmatmul.f32.gmra.mxu0 %v2017
        %v2136 = vpop.f32.mrf.mxu0
        %v2137 = vadd.f32 %v2096, %v2136
        %2138 = vmatmul.f32.gmra.mxu0 %v2018
        %v2139 = vpop.f32.mrf.mxu0
        %v2140 = vadd.f32 %v2099, %v2139
        %2141 = vdwg.mxu0
        %v2142 = vld [vmem:[%s8] sm:$0x1]
        %v2144 = vperm.slane %v2142, 0
        %v2146 = vadd.f32 %v2119, %v2144
        %v2147 = vadd.f32 %v2122, %v2144
        %v2148 = vadd.f32 %v2125, %v2144
        %v2149 = vadd.f32 %v2128, %v2144
        %v2150 = vadd.f32 %v2131, %v2144
        %v2151 = vadd.f32 %v2134, %v2144
        %v2152 = vadd.f32 %v2137, %v2144
        %v2153 = vadd.f32 %v2140, %v2144
        %v2154 = vmax.f32 %v2146, 0.0
        %v2155 = vmax.f32 %v2147, 0.0
        %v2156 = vmax.f32 %v2148, 0.0
        %v2157 = vmax.f32 %v2149, 0.0
        %v2158 = vmax.f32 %v2150, 0.0
        %v2159 = vmax.f32 %v2151, 0.0
        %v2160 = vmax.f32 %v2152, 0.0
        %v2161 = vmax.f32 %v2153, 0.0
        %2162 = vst [vmem:[%s370] sm:$0xff] %v2154
        %2163 = vst [vmem:[%s370 + $0x8] sm:$0xff] %v2155
        %2164 = vst [vmem:[%s370 + $0x10] sm:$0xff] %v2156
        %2165 = vst [vmem:[%s370 + $0x18] sm:$0xff] %v2157
        %2166 = vst [vmem:[%s370 + $0x20] sm:$0xff] %v2158
        %2167 = vst [vmem:[%s370 + $0x28] sm:$0xff] %v2159
        %2168 = vst [vmem:[%s370 + $0x30] sm:$0xff] %v2160
        %2169 = vst [vmem:[%s370 + $0x38] sm:$0xff] %v2161
        %s2170 = sand.u32 %s229, 1
        %s2171 = scalar_lea.sflag [#allocation5], %s2170
        %s2172 = sand.u32 %s229, 1
        %s2173 = smul.addr %s2172, 64
        %s2174 = scalar_lea.vmem [#allocation8], %s2173
        // Predicated region
        $region65: #{tpu_custom_call.1} parent=55 // pred_check
          %p2175 = pneg %p239
        $region66: #{tpu_custom_call.1} parent=55 // pred_check_branch
          %2177 = sbr.rel (%p2175) target = $region68
        $region67: #{tpu_custom_call.1} parent=55 // pred_region
          %2179 = vsyncadd %s2171, 0
          %s2180 = smul.addr %s27, 8
          %s2181 = smul.addr %s2180, 8
          %s2182 = scalar_lea.hbm %s9, %s2181
          %s2183 = sshll.u32 %s2174, 4
          %s2184 = int_to_ptr.vmem [resolvable:$true] %s2183
          %s2185 = sshll.u32 %s2182, 4
          %s2186 = int_to_ptr.hbm [resolvable:$true] %s2185
          %2191 = dma.vmem_to_hbm [thread:$0]  %s2184, 1024, %s2186, %s2171, 128, 128, 8
        $region68: #{tpu_custom_call.1} parent=55 // pred_fallthru
          _
      $region56: #{tpu_custom_call.1} parent=5 // pred_fallthru
        _
      %p2192 = scmp.le.s32.totalorder 2, %s22
      // Predicated region
      $region69: #{tpu_custom_call.1} parent=5 // pred_check
        %p2193 = pneg %p2192
      $region70: #{tpu_custom_call.1} parent=5 // pred_check_branch
        %2195 = sbr.rel (%p2193) target = $region72
      $region71: #{tpu_custom_call.1} parent=5 // pred_region
        %s2196 = ssub.s32 %s22, 2
        // Predicated region
        $region73: #{tpu_custom_call.1} parent=71 // pred_check
          %p2197 = pneg %p245
        $region74: #{tpu_custom_call.1} parent=71 // pred_check_branch
          %2199 = sbr.rel (%p2197) target = $region76
        $region75: #{tpu_custom_call.1} parent=71 // pred_region
          %s2200 = sand.u32 %s230, 1
          %s2201 = scalar_lea.sflag [#allocation5], %s2200
          %s2202 = sand.u32 %s230, 1
          %s2203 = smul.addr %s2202, 64
          %s2204 = scalar_lea.vmem [#allocation8], %s2203
          %2206 = dma.done %s2201, 1024
        $region76: #{tpu_custom_call.1} parent=71 // pred_fallthru
          _
      $region72: #{tpu_custom_call.1} parent=5 // pred_fallthru
        _
    $region6: #{tpu_custom_call.1} parent=1 // loop_footer
      %s26 = sadd.s32 1, %s22
    $region7: #{tpu_custom_call.1} parent=1 // loop_footer_branch
      %21 = sbr.rel target = $region3
    $region8: #{tpu_custom_call.1} parent=1 // loop_exit
      _
    %2207 = vsyncpa [#allocation4], 1
    %s2208 = scalar_lea.sflag [#allocation4], 1
    %2209 = vsyncpa %s2208, 1
    %2210 = vsyncpa [#allocation7], 1
    %2211 = vsyncpa [#allocation5], 1
    %s2212 = scalar_lea.sflag [#allocation5], 1
    %2213 = vsyncpa %s2212, 1

</llo_original>
